<compile_context>
chip_gen: v5e
topology: v5e:2x2
jax: 0.10.0
libtpu: 0.0.40
codegen_flags: <defaults>
</compile_context>

<pallas_src>
import functools

import jax
import jax.numpy as jnp
from jax.experimental import pallas as pl
from jax.experimental.pallas import tpu as pltpu

_DILATIONS = (2, 4, 8, 16)
_MAXPAD = max(_DILATIONS)           # 16 == padding/dilation of atrous_block24


def _aspp_kernel(x_hbm, w_hbm, b_ref, o_ref,
                 xflat_ref, w_ref, slab_ref, sem_x, sem_w,
                 *, offsets, groups, H, W, base, cin_pad):
    """One image per grid step (grid axis is sequential / 'arbitrary').

    x_hbm    : (N, Cin_pad, H*W)    input, left in HBM (manual DMA)
    w_hbm    : (D, T*Cin_pad)       wout-folded tap weights, left in HBM
    b_ref    : (D, 1)               fused bias (f32, VMEM block)
    o_ref    : (1, D, H*W)          output tile
    xflat_ref: (2, Cin_pad, width)  zero-guarded, double-buffered padded image
    w_ref    : (D, T*Cin_pad)       persistent single VMEM copy of the weights
    slab_ref : (Gmax*Cin_pad, H*W)  per-group im2col mini-slab (reused)
    """
    HW = H * W
    n = pl.program_id(0)
    num_imgs = pl.num_programs(0)
    slot = jax.lax.rem(n, 2)

    def x_copy(img, dst_slot):
        return pltpu.make_async_copy(
            x_hbm.at[img],
            xflat_ref.at[dst_slot, :, pl.ds(base, HW)],
            sem_x.at[dst_slot])

    @pl.when(n == 0)
    def _init():
        # Folded weights: fetched exactly once into persistent VMEM scratch.
        pltpu.make_async_copy(w_hbm, w_ref, sem_w).start()
        # Zero ONLY the guard columns, once.  The interior [base, base+HW) is
        # fully overwritten every step by the image DMA; the guards never are,
        # and they implement the conv zero padding for vertical (dy) taps.
        nslot, crows, width = xflat_ref.shape
        xflat_ref[:, :, :base] = jnp.zeros((nslot, crows, base),
                                           xflat_ref.dtype)
        tail = width - (base + HW)
        xflat_ref[:, :, base + HW:] = jnp.zeros((nslot, crows, tail),
                                                xflat_ref.dtype)
        x_copy(0, 0).start()
        pltpu.make_async_copy(w_hbm, w_ref, sem_w).wait()

    # Current image must have landed; immediately prefetch the next one into
    # the other slab so the DMA overlaps this step's compute.
    x_copy(n, slot).wait()

    @pl.when(n + 1 < num_imgs)
    def _prefetch():
        x_copy(n + 1, 1 - slot).start()

    # The 8 distinct horizontal-wrap masks (dx in {+/-2,4,8,16}), hoisted out
    # of the tap loop and built from a single iota.
    col = jax.lax.broadcasted_iota(jnp.int32, (1, HW), 1) % W
    masks = {dx: (col >= -dx) & (col < W - dx)
             for dx in sorted({d for _, d in offsets if d != 0})}

    # Tap-group chunked contraction: acc += W_g @ slab_g, f32 accumulation.
    acc = None
    for g_start, g_end in groups:
        for j, t in enumerate(range(g_start, g_end)):
            dy, dx = offsets[t]
            start = base + dy * W + dx
            piece = xflat_ref[slot, :, pl.ds(start, HW)]
            if dx != 0:
                piece = jnp.where(masks[dx], piece, jnp.zeros_like(piece))
            slab_ref[j * cin_pad:(j + 1) * cin_pad, :] = piece
        rows = (g_end - g_start) * cin_pad
        part = jnp.dot(w_ref[:, g_start * cin_pad:g_end * cin_pad],
                       slab_ref[:rows, :],
                       preferred_element_type=jnp.float32)
        acc = part if acc is None else acc + part

    acc = acc + b_ref[...]
    o_ref[0] = acc.astype(o_ref.dtype)


def _fold_weights(params, cin_pad):
    """Fold the final 1x1 projection into every branch tap (exact), padding
    each tap's Cin rows to the sublane tile so the K layout is tile-aligned."""
    w1 = params["w1"]                                     # (Cin, D)
    wout = params["wout"]                                 # (5D, D)
    D = wout.shape[-1]
    Cin = w1.shape[0]
    blocks = [wout[i * D:(i + 1) * D] for i in range(5)]  # (D, D) each

    def pad_tap(w):                                       # (Cin, D)->(cin_pad, D)
        return jnp.pad(w, ((0, cin_pad - Cin), (0, 0)))

    center = jnp.dot(w1, blocks[0])                       # 1x1 branch
    tap_ws, tap_offs = [], []
    for b, d in enumerate(_DILATIONS):
        wd = params[f"w{d}"]                              # (3, 3, Cin, D)
        blk = blocks[b + 1]
        for ky in range(3):
            for kx in range(3):
                wtap = jnp.dot(wd[ky, kx], blk)           # (Cin, D)
                if ky == 1 and kx == 1:
                    center = center + wtap                # all centers share (0,0)
                else:
                    tap_ws.append(pad_tap(wtap))
                    tap_offs.append(((ky - 1) * d, (kx - 1) * d))

    tap_ws = [pad_tap(center)] + tap_ws
    tap_offs = [(0, 0)] + tap_offs

    wstack = jnp.concatenate(tap_ws, axis=0).T            # (D, T*cin_pad)
    b_cat = jnp.concatenate([params["b1"], params["b2"], params["b4"],
                             params["b8"], params["b16"]], axis=-1)
    b_eff = (jnp.dot(b_cat, wout) + params["bout"]).T     # (D, 1)
    return wstack, b_eff, tuple(tap_offs)


def aspp_forward(x_nchw, params, *, compute_dtype=jnp.bfloat16, out_dtype=None):
    N, Cin, H, W = x_nchw.shape
    P = _MAXPAD
    HW = H * W
    if out_dtype is None:
        out_dtype = compute_dtype

    # Pad Cin to the sublane tile: 8 for 4-byte dtypes, 16 for bf16.
    itemsize = jnp.dtype(compute_dtype).itemsize
    sub = 32 // itemsize
    cin_pad = -(-Cin // sub) * sub

    wstack, b_eff, offsets = _fold_weights(params, cin_pad)
    D = wstack.shape[0]
    T = len(offsets)                                      # 33

    # Tap groups: [center + 8 taps of dil 2] + [8 taps] per remaining dilation.
    groups, s = [], 0
    for sz in [1 + 8] + [8] * (len(_DILATIONS) - 1):
        groups.append((s, s + sz))
        s += sz
    assert s == T
    gmax = max(e - b for b, e in groups)

    # Guarded flattened-image geometry (128-lane-aligned interior; the head
    # guard covers the most negative tap read, the tail guard the largest).
    base = -(-(P * W + P) // 128) * 128
    width = base + (H + P) * W + P

    x_pad = jnp.pad(x_nchw.reshape(N, Cin, HW),            # free reshape
                    ((0, 0), (0, cin_pad - Cin), (0, 0))).astype(compute_dtype)
    wstack = wstack.astype(compute_dtype)
    b_eff = b_eff.astype(jnp.float32)

    kernel = functools.partial(_aspp_kernel, offsets=offsets,
                               groups=tuple(groups), H=H, W=W,
                               base=base, cin_pad=cin_pad)

    scratch_bytes = (2 * cin_pad * width + D * T * cin_pad
                     + gmax * cin_pad * HW) * itemsize
    out_bytes = N * D * HW * jnp.dtype(out_dtype).itemsize
    vmem_limit = int(min(100 << 20, max(8 << 20, 4 * scratch_bytes)))

    cost = pl.CostEstimate(
        flops=int(2 * N * D * T * cin_pad * HW),
        transcendentals=0,
        bytes_accessed=int(x_pad.size * itemsize + wstack.size * itemsize
                           + b_eff.size * 4 + out_bytes))

    out = pl.pallas_call(
        kernel,
        out_shape=jax.ShapeDtypeStruct((N, D, HW), out_dtype),
        grid=(N,),
        in_specs=[
            pl.BlockSpec(memory_space=pl.ANY),        # x: manual halo-capable DMA
            pl.BlockSpec(memory_space=pl.ANY),        # folded weights: fetched once
            pl.BlockSpec((D, 1), lambda n: (0, 0)),   # fused bias (tiny)
        ],
        out_specs=pl.BlockSpec((1, D, HW), lambda n: (n, 0, 0)),
        scratch_shapes=[
            pltpu.VMEM((2, cin_pad, width), compute_dtype),   # guarded image (2 slots)
            pltpu.VMEM((D, T * cin_pad), compute_dtype),      # single weight copy
            pltpu.VMEM((gmax * cin_pad, HW), compute_dtype),  # per-group mini-slab
            pltpu.SemaphoreType.DMA((2,)),                    # per-slot image DMA sems
            pltpu.SemaphoreType.DMA,                          # one-shot weight DMA sem
        ],
        compiler_params=pltpu.CompilerParams(
            # The cross-step prefetch chain and the once-only guard/weight init
            # require sequential batch iteration; megacore parallelism comes
            # from a spatial grid axis at production shapes (see TODO above).
            dimension_semantics=("arbitrary",),
            vmem_limit_bytes=vmem_limit),
        cost_estimate=cost,
    )(x_pad, wstack, b_eff)

    # Free reshape: (N, D, H*W) and (N, D, H, W) share the same HBM layout.
    return out.reshape(N, D, H, W)


def init_params(key, in_channel, depth):
    ks = jax.random.split(key, 12)

    def rnd(k, shape, fan_in):
        return jax.random.normal(k, shape, jnp.float32) / jnp.sqrt(
            jnp.float32(fan_in))

    p = {}
    p["w1"] = rnd(ks[0], (in_channel, depth), in_channel)
    p["b1"] = rnd(ks[1], (1, depth), in_channel)
    for i, d in enumerate(_DILATIONS):
        p[f"w{d}"] = rnd(ks[2 + 2 * i], (3, 3, in_channel, depth),
                         9 * in_channel)
        p[f"b{d}"] = rnd(ks[3 + 2 * i], (1, depth), 9 * in_channel)
    p["wout"] = rnd(ks[10], (5 * depth, depth), 5 * depth)
    p["bout"] = rnd(ks[11], (1, depth), 5 * depth)
    return p


def aspp_reference(x_nchw, params):
    """Pure-JAX reference using lax.conv_general_dilated (NHWC)."""
    x = jnp.transpose(x_nchw, (0, 2, 3, 1))
    Cin = x.shape[-1]
    depth = params["w1"].shape[-1]

    def conv(inp, w_hwio, b, pad, dil):
        y = jax.lax.conv_general_dilated(
            inp, w_hwio, window_strides=(1, 1),
            padding=[(pad, pad), (pad, pad)],
            rhs_dilation=(dil, dil),
            dimension_numbers=("NHWC", "HWIO", "NHWC"))
        return y + b.reshape(1, 1, 1, -1)

    br = [conv(x, params["w1"].reshape(1, 1, Cin, depth), params["b1"], 0, 1)]
    for d in _DILATIONS:
        br.append(conv(x, params[f"w{d}"], params[f"b{d}"], d, d))
    cat = jnp.concatenate(br, axis=-1)
    out = conv(cat, params["wout"].reshape(1, 1, 5 * depth, depth),
               params["bout"], 0, 1)
    return jnp.transpose(out, (0, 3, 1, 2))


if __name__ == "__main__":
    key = jax.random.PRNGKey(0)
    kx, kp = jax.random.split(key)

    N, Cin, H, W = 2, 4, 16, 16
    depth = 32

    x = jax.random.normal(kx, (N, Cin, H, W), jnp.float32)
    params = init_params(kp, Cin, depth)

    ref = aspp_reference(x, params)

    # Exactness of the wout-fold + grouped-im2col decomposition (f32 path).
    out_f32 = jax.block_until_ready(
        aspp_forward(x, params, compute_dtype=jnp.float32))
    assert out_f32.shape == (N, depth, H, W), out_f32.shape
    err_f32 = float(jnp.max(jnp.abs(out_f32.astype(jnp.float32) - ref)))
    assert err_f32 < 1e-3, f"f32 mismatch vs reference: {err_f32}"

    # Default performance path: bf16 operands/output, f32 accumulation.
    out_bf16 = jax.block_until_ready(aspp_forward(x, params))
    assert out_bf16.shape == (N, depth, H, W), out_bf16.shape
    err_bf16 = float(jnp.max(jnp.abs(out_bf16.astype(jnp.float32) - ref)))
    assert err_bf16 < 5e-2, f"bf16 mismatch vs reference: {err_bf16}"

    print("KERNEL_OK")
</pallas_src>

<mosaic_0001>
module attributes {stable_mosaic.version = 11 : i64} {
  func.func @_aspp_kernel(%arg0: i32, %arg1: memref<2x8x256xf32, #tpu.memory_space<any>>, %arg2: memref<32x264xf32, #tpu.memory_space<any>>, %arg3: memref<32x1xf32, #tpu.memory_space<vmem>>, %arg4: memref<1x32x256xf32, #tpu.memory_space<vmem>>, %arg5: memref<2x8x912xf32, #tpu.memory_space<vmem>>, %arg6: memref<32x264xf32, #tpu.memory_space<vmem>>, %arg7: memref<72x256xf32, #tpu.memory_space<vmem>>, %arg8: memref<2x!tpu.dma_semaphore, #tpu.memory_space<semaphore_mem>>, %arg9: memref<!tpu.dma_semaphore, #tpu.memory_space<semaphore_mem>>) attributes {dimension_semantics = [#tpu.dimension_semantics<arbitrary>], iteration_bounds = array<i64: 2>, scalar_prefetch = 0 : i64, scratch_operands = 5 : i64, tpu.core_type = #tpu.core_type<tc>, window_params = [{}, {}, {pipeline_mode = #tpu.pipeline_mode<synchronous>, transform_indices = @transform_2, window_bounds = array<i64: 32, 1>}, {transform_indices = @transform_3, window_bounds = array<i64: 1, 32, 256>}]} {
    %c2_i32 = arith.constant 2 : i32
    %0 = arith.remsi %arg0, %c2_i32 : i32
    %c0_i32 = arith.constant 0 : i32
    %1 = arith.cmpi eq, %arg0, %c0_i32 : i32
    %2 = arith.extui %1 : i1 to i32
    %c0_i32_0 = arith.constant 0 : i32
    %3 = arith.cmpi ne, %2, %c0_i32_0 : i32
    scf.if %3 {
      tpu.enqueue_dma source(%arg2 : memref<32x264xf32, #tpu.memory_space<any>>) target(%arg6 : memref<32x264xf32, #tpu.memory_space<vmem>>) target_semaphore(%arg9 : memref<!tpu.dma_semaphore, #tpu.memory_space<semaphore_mem>>)
      %cst_150 = arith.constant 0.000000e+00 : f32
      %320 = vector.broadcast %cst_150 : f32 to vector<2x8x384xf32>
      %c0_151 = arith.constant 0 : index
      %c0_152 = arith.constant 0 : index
      %c0_153 = arith.constant 0 : index
      %321 = vector.load %arg5[%c0_151, %c0_152, %c0_153] : memref<2x8x912xf32, #tpu.memory_space<vmem>>, vector<2x8x384xf32>
      tpu.vector_store %arg5[%c0_151, %c0_152, %c0_153], %320 {strides = array<i32>} : memref<2x8x912xf32, #tpu.memory_space<vmem>>, vector<2x8x384xf32>,
      %cst_154 = arith.constant 0.000000e+00 : f32
      %322 = vector.broadcast %cst_154 : f32 to vector<2x8x272xf32>
      %c0_155 = arith.constant 0 : index
      %c0_156 = arith.constant 0 : index
      %c640_157 = arith.constant 640 : index
      %323 = vector.load %arg5[%c0_155, %c0_156, %c640_157] : memref<2x8x912xf32, #tpu.memory_space<vmem>>, vector<2x8x272xf32>
      tpu.vector_store %arg5[%c0_155, %c0_156, %c640_157], %322 {strides = array<i32>} : memref<2x8x912xf32, #tpu.memory_space<vmem>>, vector<2x8x272xf32>,
      %c0_i32_158 = arith.constant 0 : i32
      %c0_i32_159 = arith.constant 0 : i32
      %c0_i32_160 = arith.constant 0 : i32
      %c0_i32_161 = arith.constant 0 : i32
      %c0_i32_162 = arith.constant 0 : i32
      %324 = tpu.memref_slice %arg1[%c0_i32_158, %c0_i32_161, %c0_i32_162] : memref<2x8x256xf32, #tpu.memory_space<any>> -> memref<1x8x256xf32, #tpu.memory_space<any>>
      %325 = tpu.memref_squeeze %324 : memref<1x8x256xf32, #tpu.memory_space<any>> -> memref<8x256xf32, #tpu.memory_space<any>>
      %c0_i32_163 = arith.constant 0 : i32
      %c384_i32_164 = arith.constant 384 : i32
      %326 = tpu.memref_slice %arg5[%c0_i32_159, %c0_i32_163, %c384_i32_164] : memref<2x8x912xf32, #tpu.memory_space<vmem>> -> memref<1x8x256xf32, #tpu.memory_space<vmem>>
      %327 = tpu.memref_squeeze %326 : memref<1x8x256xf32, #tpu.memory_space<vmem>> -> memref<8x256xf32, #tpu.memory_space<vmem>>
      %328 = tpu.memref_slice %arg8[%c0_i32_160] : memref<2x!tpu.dma_semaphore, #tpu.memory_space<semaphore_mem>> -> memref<1x!tpu.dma_semaphore, #tpu.memory_space<semaphore_mem>>
      %329 = tpu.memref_squeeze %328 : memref<1x!tpu.dma_semaphore, #tpu.memory_space<semaphore_mem>> -> memref<!tpu.dma_semaphore, #tpu.memory_space<semaphore_mem>>
      tpu.enqueue_dma source(%325 : memref<8x256xf32, #tpu.memory_space<any>>) target(%327 : memref<8x256xf32, #tpu.memory_space<vmem>>) target_semaphore(%329 : memref<!tpu.dma_semaphore, #tpu.memory_space<semaphore_mem>>)
      tpu.wait_dma2 semaphore(%arg9 : memref<!tpu.dma_semaphore, #tpu.memory_space<semaphore_mem>>) src(%arg2 : memref<32x264xf32, #tpu.memory_space<any>>) dst(%arg6 : memref<32x264xf32, #tpu.memory_space<vmem>>)
    } else {
    }
    %c0_i32_1 = arith.constant 0 : i32
    %c0_i32_2 = arith.constant 0 : i32
    %4 = tpu.memref_slice %arg1[%arg0, %c0_i32_1, %c0_i32_2] : memref<2x8x256xf32, #tpu.memory_space<any>> -> memref<1x8x256xf32, #tpu.memory_space<any>>
    %5 = tpu.memref_squeeze %4 : memref<1x8x256xf32, #tpu.memory_space<any>> -> memref<8x256xf32, #tpu.memory_space<any>>
    %c0_i32_3 = arith.constant 0 : i32
    %c384_i32 = arith.constant 384 : i32
    %6 = tpu.memref_slice %arg5[%0, %c0_i32_3, %c384_i32] : memref<2x8x912xf32, #tpu.memory_space<vmem>> -> memref<1x8x256xf32, #tpu.memory_space<vmem>>
    %7 = tpu.memref_squeeze %6 : memref<1x8x256xf32, #tpu.memory_space<vmem>> -> memref<8x256xf32, #tpu.memory_space<vmem>>
    %8 = tpu.memref_slice %arg8[%0] : memref<2x!tpu.dma_semaphore, #tpu.memory_space<semaphore_mem>> -> memref<1x!tpu.dma_semaphore, #tpu.memory_space<semaphore_mem>>
    %9 = tpu.memref_squeeze %8 : memref<1x!tpu.dma_semaphore, #tpu.memory_space<semaphore_mem>> -> memref<!tpu.dma_semaphore, #tpu.memory_space<semaphore_mem>>
    tpu.wait_dma2 semaphore(%9 : memref<!tpu.dma_semaphore, #tpu.memory_space<semaphore_mem>>) src(%5 : memref<8x256xf32, #tpu.memory_space<any>>) dst(%7 : memref<8x256xf32, #tpu.memory_space<vmem>>)
    %c1_i32 = arith.constant 1 : i32
    %10 = arith.addi %arg0, %c1_i32 : i32
    %c2_i32_4 = arith.constant 2 : i32
    %11 = arith.cmpi slt, %10, %c2_i32_4 : i32
    %12 = arith.extui %11 : i1 to i32
    %c0_i32_5 = arith.constant 0 : i32
    %13 = arith.cmpi ne, %12, %c0_i32_5 : i32
    scf.if %13 {
      %c1_i32_150 = arith.constant 1 : i32
      %320 = arith.addi %arg0, %c1_i32_150 : i32
      %c1_i32_151 = arith.constant 1 : i32
      %321 = arith.subi %c1_i32_151, %0 : i32
      %c0_i32_152 = arith.constant 0 : i32
      %c0_i32_153 = arith.constant 0 : i32
      %322 = tpu.memref_slice %arg1[%320, %c0_i32_152, %c0_i32_153] : memref<2x8x256xf32, #tpu.memory_space<any>> -> memref<1x8x256xf32, #tpu.memory_space<any>>
      %323 = tpu.memref_squeeze %322 : memref<1x8x256xf32, #tpu.memory_space<any>> -> memref<8x256xf32, #tpu.memory_space<any>>
      %c0_i32_154 = arith.constant 0 : i32
      %c384_i32_155 = arith.constant 384 : i32
      %324 = tpu.memref_slice %arg5[%321, %c0_i32_154, %c384_i32_155] : memref<2x8x912xf32, #tpu.memory_space<vmem>> -> memref<1x8x256xf32, #tpu.memory_space<vmem>>
      %325 = tpu.memref_squeeze %324 : memref<1x8x256xf32, #tpu.memory_space<vmem>> -> memref<8x256xf32, #tpu.memory_space<vmem>>
      %326 = tpu.memref_slice %arg8[%321] : memref<2x!tpu.dma_semaphore, #tpu.memory_space<semaphore_mem>> -> memref<1x!tpu.dma_semaphore, #tpu.memory_space<semaphore_mem>>
      %327 = tpu.memref_squeeze %326 : memref<1x!tpu.dma_semaphore, #tpu.memory_space<semaphore_mem>> -> memref<!tpu.dma_semaphore, #tpu.memory_space<semaphore_mem>>
      tpu.enqueue_dma source(%323 : memref<8x256xf32, #tpu.memory_space<any>>) target(%325 : memref<8x256xf32, #tpu.memory_space<vmem>>) target_semaphore(%327 : memref<!tpu.dma_semaphore, #tpu.memory_space<semaphore_mem>>)
    } else {
    }
    %14 = tpu.iota {dimensions = array<i32: 1>} : vector<1x256xi32>
    %c16_i32 = arith.constant 16 : i32
    %c0_i32_6 = arith.constant 0 : i32
    %15 = arith.cmpi eq, %c16_i32, %c0_i32_6 : i32
    %c1_i32_7 = arith.constant 1 : i32
    %16 = arith.select %15, %c1_i32_7, %c16_i32 : i32
    %17 = vector.broadcast %16 : i32 to vector<1x256xi32>
    %18 = arith.remsi %14, %17 : vector<1x256xi32>
    %c0_i32_8 = arith.constant 0 : i32
    %19 = vector.broadcast %c0_i32_8 : i32 to vector<1x256xi32>
    %20 = arith.cmpi ne, %18, %19 : vector<1x256xi32>
    %c0_i32_9 = arith.constant 0 : i32
    %21 = vector.broadcast %c0_i32_9 : i32 to vector<1x256xi32>
    %22 = arith.cmpi slt, %18, %21 : vector<1x256xi32>
    %c0_i32_10 = arith.constant 0 : i32
    %23 = arith.cmpi slt, %16, %c0_i32_10 : i32
    %24 = vector.broadcast %23 : i1 to vector<1x256xi1>
    %25 = vector.broadcast %24 : vector<1x256xi1> to vector<1x256xi1>
    %26 = arith.xori %22, %25 : vector<1x256xi1>
    %27 = arith.andi %26, %20 : vector<1x256xi1>
    %28 = vector.broadcast %16 : i32 to vector<1x256xi32>
    %29 = arith.addi %18, %28 : vector<1x256xi32>
    %30 = arith.select %27, %29, %18 : vector<1x256xi1>, vector<1x256xi32>
    %c16_i32_11 = arith.constant 16 : i32
    %31 = vector.broadcast %c16_i32_11 : i32 to vector<1x256xi32>
    %32 = arith.cmpi sge, %30, %31 : vector<1x256xi32>
    %c32_i32 = arith.constant 32 : i32
    %33 = vector.broadcast %c32_i32 : i32 to vector<1x256xi32>
    %34 = arith.cmpi slt, %30, %33 : vector<1x256xi32>
    %35 = arith.andi %32, %34 : vector<1x256xi1>
    %c8_i32 = arith.constant 8 : i32
    %36 = vector.broadcast %c8_i32 : i32 to vector<1x256xi32>
    %37 = arith.cmpi sge, %30, %36 : vector<1x256xi32>
    %c24_i32 = arith.constant 24 : i32
    %38 = vector.broadcast %c24_i32 : i32 to vector<1x256xi32>
    %39 = arith.cmpi slt, %30, %38 : vector<1x256xi32>
    %40 = arith.andi %37, %39 : vector<1x256xi1>
    %c4_i32 = arith.constant 4 : i32
    %41 = vector.broadcast %c4_i32 : i32 to vector<1x256xi32>
    %42 = arith.cmpi sge, %30, %41 : vector<1x256xi32>
    %c20_i32 = arith.constant 20 : i32
    %43 = vector.broadcast %c20_i32 : i32 to vector<1x256xi32>
    %44 = arith.cmpi slt, %30, %43 : vector<1x256xi32>
    %45 = arith.andi %42, %44 : vector<1x256xi1>
    %c2_i32_12 = arith.constant 2 : i32
    %46 = vector.broadcast %c2_i32_12 : i32 to vector<1x256xi32>
    %47 = arith.cmpi sge, %30, %46 : vector<1x256xi32>
    %c18_i32 = arith.constant 18 : i32
    %48 = vector.broadcast %c18_i32 : i32 to vector<1x256xi32>
    %49 = arith.cmpi slt, %30, %48 : vector<1x256xi32>
    %50 = arith.andi %47, %49 : vector<1x256xi1>
    %c-2_i32 = arith.constant -2 : i32
    %51 = vector.broadcast %c-2_i32 : i32 to vector<1x256xi32>
    %52 = arith.cmpi sge, %30, %51 : vector<1x256xi32>
    %c14_i32 = arith.constant 14 : i32
    %53 = vector.broadcast %c14_i32 : i32 to vector<1x256xi32>
    %54 = arith.cmpi slt, %30, %53 : vector<1x256xi32>
    %55 = arith.andi %52, %54 : vector<1x256xi1>
    %c-4_i32 = arith.constant -4 : i32
    %56 = vector.broadcast %c-4_i32 : i32 to vector<1x256xi32>
    %57 = arith.cmpi sge, %30, %56 : vector<1x256xi32>
    %c12_i32 = arith.constant 12 : i32
    %58 = vector.broadcast %c12_i32 : i32 to vector<1x256xi32>
    %59 = arith.cmpi slt, %30, %58 : vector<1x256xi32>
    %60 = arith.andi %57, %59 : vector<1x256xi1>
    %c-8_i32 = arith.constant -8 : i32
    %61 = vector.broadcast %c-8_i32 : i32 to vector<1x256xi32>
    %62 = arith.cmpi sge, %30, %61 : vector<1x256xi32>
    %c8_i32_13 = arith.constant 8 : i32
    %63 = vector.broadcast %c8_i32_13 : i32 to vector<1x256xi32>
    %64 = arith.cmpi slt, %30, %63 : vector<1x256xi32>
    %65 = arith.andi %62, %64 : vector<1x256xi1>
    %c-16_i32 = arith.constant -16 : i32
    %66 = vector.broadcast %c-16_i32 : i32 to vector<1x256xi32>
    %67 = arith.cmpi sge, %30, %66 : vector<1x256xi32>
    %c0_i32_14 = arith.constant 0 : i32
    %68 = vector.broadcast %c0_i32_14 : i32 to vector<1x256xi32>
    %69 = arith.cmpi slt, %30, %68 : vector<1x256xi32>
    %70 = arith.andi %67, %69 : vector<1x256xi1>
    %71 = arith.index_cast %0 : i32 to index
    %c0 = arith.constant 0 : index
    %c384 = arith.constant 384 : index
    %72 = vector.load %arg5[%71, %c0, %c384] : memref<2x8x912xf32, #tpu.memory_space<vmem>>, vector<1x8x256xf32>
    %73 = vector.shape_cast %72 : vector<1x8x256xf32> to vector<8x256xf32>
    %c0_15 = arith.constant 0 : index
    %c0_16 = arith.constant 0 : index
    %74 = vector.load %arg7[%c0_15, %c0_16] : memref<72x256xf32, #tpu.memory_space<vmem>>, vector<8x256xf32>
    tpu.vector_store %arg7[%c0_15, %c0_16], %73 {strides = array<i32>} : memref<72x256xf32, #tpu.memory_space<vmem>>, vector<8x256xf32>,
    %75 = arith.index_cast %0 : i32 to index
    %c0_17 = arith.constant 0 : index
    %c350 = arith.constant 350 : index
    %76 = vector.load %arg5[%75, %c0_17, %c350] : memref<2x8x912xf32, #tpu.memory_space<vmem>>, vector<1x8x256xf32>
    %77 = vector.shape_cast %76 : vector<1x8x256xf32> to vector<8x256xf32>
    %cst = arith.constant 0.000000e+00 : f32
    %78 = vector.broadcast %cst : f32 to vector<8x256xf32>
    %79 = vector.shape_cast %50 : vector<1x256xi1> to vector<1x256xi1>
    %80 = vector.broadcast %79 : vector<1x256xi1> to vector<8x256xi1>
    %81 = arith.select %80, %77, %78 : vector<8x256xi1>, vector<8x256xf32>
    %c8 = arith.constant 8 : index
    %c0_18 = arith.constant 0 : index
    %82 = vector.load %arg7[%c8, %c0_18] : memref<72x256xf32, #tpu.memory_space<vmem>>, vector<8x256xf32>
    tpu.vector_store %arg7[%c8, %c0_18], %81 {strides = array<i32>} : memref<72x256xf32, #tpu.memory_space<vmem>>, vector<8x256xf32>,
    %83 = arith.index_cast %0 : i32 to index
    %c0_19 = arith.constant 0 : index
    %c352 = arith.constant 352 : index
    %84 = vector.load %arg5[%83, %c0_19, %c352] : memref<2x8x912xf32, #tpu.memory_space<vmem>>, vector<1x8x256xf32>
    %85 = vector.shape_cast %84 : vector<1x8x256xf32> to vector<8x256xf32>
    %c16 = arith.constant 16 : index
    %c0_20 = arith.constant 0 : index
    %86 = vector.load %arg7[%c16, %c0_20] : memref<72x256xf32, #tpu.memory_space<vmem>>, vector<8x256xf32>
    tpu.vector_store %arg7[%c16, %c0_20], %85 {strides = array<i32>} : memref<72x256xf32, #tpu.memory_space<vmem>>, vector<8x256xf32>,
    %87 = arith.index_cast %0 : i32 to index
    %c0_21 = arith.constant 0 : index
    %c354 = arith.constant 354 : index
    %88 = vector.load %arg5[%87, %c0_21, %c354] : memref<2x8x912xf32, #tpu.memory_space<vmem>>, vector<1x8x256xf32>
    %89 = vector.shape_cast %88 : vector<1x8x256xf32> to vector<8x256xf32>
    %cst_22 = arith.constant 0.000000e+00 : f32
    %90 = vector.broadcast %cst_22 : f32 to vector<8x256xf32>
    %91 = vector.shape_cast %55 : vector<1x256xi1> to vector<1x256xi1>
    %92 = vector.broadcast %91 : vector<1x256xi1> to vector<8x256xi1>
    %93 = arith.select %92, %89, %90 : vector<8x256xi1>, vector<8x256xf32>
    %c24 = arith.constant 24 : index
    %c0_23 = arith.constant 0 : index
    %94 = vector.load %arg7[%c24, %c0_23] : memref<72x256xf32, #tpu.memory_space<vmem>>, vector<8x256xf32>
    tpu.vector_store %arg7[%c24, %c0_23], %93 {strides = array<i32>} : memref<72x256xf32, #tpu.memory_space<vmem>>, vector<8x256xf32>,
    %95 = arith.index_cast %0 : i32 to index
    %c0_24 = arith.constant 0 : index
    %c382 = arith.constant 382 : index
    %96 = vector.load %arg5[%95, %c0_24, %c382] : memref<2x8x912xf32, #tpu.memory_space<vmem>>, vector<1x8x256xf32>
    %97 = vector.shape_cast %96 : vector<1x8x256xf32> to vector<8x256xf32>
    %cst_25 = arith.constant 0.000000e+00 : f32
    %98 = vector.broadcast %cst_25 : f32 to vector<8x256xf32>
    %99 = vector.shape_cast %50 : vector<1x256xi1> to vector<1x256xi1>
    %100 = vector.broadcast %99 : vector<1x256xi1> to vector<8x256xi1>
    %101 = arith.select %100, %97, %98 : vector<8x256xi1>, vector<8x256xf32>
    %c32 = arith.constant 32 : index
    %c0_26 = arith.constant 0 : index
    %102 = vector.load %arg7[%c32, %c0_26] : memref<72x256xf32, #tpu.memory_space<vmem>>, vector<8x256xf32>
    tpu.vector_store %arg7[%c32, %c0_26], %101 {strides = array<i32>} : memref<72x256xf32, #tpu.memory_space<vmem>>, vector<8x256xf32>,
    %103 = arith.index_cast %0 : i32 to index
    %c0_27 = arith.constant 0 : index
    %c386 = arith.constant 386 : index
    %104 = vector.load %arg5[%103, %c0_27, %c386] : memref<2x8x912xf32, #tpu.memory_space<vmem>>, vector<1x8x256xf32>
    %105 = vector.shape_cast %104 : vector<1x8x256xf32> to vector<8x256xf32>
    %cst_28 = arith.constant 0.000000e+00 : f32
    %106 = vector.broadcast %cst_28 : f32 to vector<8x256xf32>
    %107 = vector.shape_cast %55 : vector<1x256xi1> to vector<1x256xi1>
    %108 = vector.broadcast %107 : vector<1x256xi1> to vector<8x256xi1>
    %109 = arith.select %108, %105, %106 : vector<8x256xi1>, vector<8x256xf32>
    %c40 = arith.constant 40 : index
    %c0_29 = arith.constant 0 : index
    %110 = vector.load %arg7[%c40, %c0_29] : memref<72x256xf32, #tpu.memory_space<vmem>>, vector<8x256xf32>
    tpu.vector_store %arg7[%c40, %c0_29], %109 {strides = array<i32>} : memref<72x256xf32, #tpu.memory_space<vmem>>, vector<8x256xf32>,
    %111 = arith.index_cast %0 : i32 to index
    %c0_30 = arith.constant 0 : index
    %c414 = arith.constant 414 : index
    %112 = vector.load %arg5[%111, %c0_30, %c414] : memref<2x8x912xf32, #tpu.memory_space<vmem>>, vector<1x8x256xf32>
    %113 = vector.shape_cast %112 : vector<1x8x256xf32> to vector<8x256xf32>
    %cst_31 = arith.constant 0.000000e+00 : f32
    %114 = vector.broadcast %cst_31 : f32 to vector<8x256xf32>
    %115 = vector.shape_cast %50 : vector<1x256xi1> to vector<1x256xi1>
    %116 = vector.broadcast %115 : vector<1x256xi1> to vector<8x256xi1>
    %117 = arith.select %116, %113, %114 : vector<8x256xi1>, vector<8x256xf32>
    %c48 = arith.constant 48 : index
    %c0_32 = arith.constant 0 : index
    %118 = vector.load %arg7[%c48, %c0_32] : memref<72x256xf32, #tpu.memory_space<vmem>>, vector<8x256xf32>
    tpu.vector_store %arg7[%c48, %c0_32], %117 {strides = array<i32>} : memref<72x256xf32, #tpu.memory_space<vmem>>, vector<8x256xf32>,
    %119 = arith.index_cast %0 : i32 to index
    %c0_33 = arith.constant 0 : index
    %c416 = arith.constant 416 : index
    %120 = vector.load %arg5[%119, %c0_33, %c416] : memref<2x8x912xf32, #tpu.memory_space<vmem>>, vector<1x8x256xf32>
    %121 = vector.shape_cast %120 : vector<1x8x256xf32> to vector<8x256xf32>
    %c56 = arith.constant 56 : index
    %c0_34 = arith.constant 0 : index
    %122 = vector.load %arg7[%c56, %c0_34] : memref<72x256xf32, #tpu.memory_space<vmem>>, vector<8x256xf32>
    tpu.vector_store %arg7[%c56, %c0_34], %121 {strides = array<i32>} : memref<72x256xf32, #tpu.memory_space<vmem>>, vector<8x256xf32>,
    %123 = arith.index_cast %0 : i32 to index
    %c0_35 = arith.constant 0 : index
    %c418 = arith.constant 418 : index
    %124 = vector.load %arg5[%123, %c0_35, %c418] : memref<2x8x912xf32, #tpu.memory_space<vmem>>, vector<1x8x256xf32>
    %125 = vector.shape_cast %124 : vector<1x8x256xf32> to vector<8x256xf32>
    %cst_36 = arith.constant 0.000000e+00 : f32
    %126 = vector.broadcast %cst_36 : f32 to vector<8x256xf32>
    %127 = vector.shape_cast %55 : vector<1x256xi1> to vector<1x256xi1>
    %128 = vector.broadcast %127 : vector<1x256xi1> to vector<8x256xi1>
    %129 = arith.select %128, %125, %126 : vector<8x256xi1>, vector<8x256xf32>
    %c64 = arith.constant 64 : index
    %c0_37 = arith.constant 0 : index
    %130 = vector.load %arg7[%c64, %c0_37] : memref<72x256xf32, #tpu.memory_space<vmem>>, vector<8x256xf32>
    tpu.vector_store %arg7[%c64, %c0_37], %129 {strides = array<i32>} : memref<72x256xf32, #tpu.memory_space<vmem>>, vector<8x256xf32>,
    %c0_38 = arith.constant 0 : index
    %c0_39 = arith.constant 0 : index
    %131 = vector.load %arg6[%c0_38, %c0_39] : memref<32x264xf32, #tpu.memory_space<vmem>>, vector<32x72xf32>
    %c0_40 = arith.constant 0 : index
    %c0_41 = arith.constant 0 : index
    %132 = vector.load %arg7[%c0_40, %c0_41] : memref<72x256xf32, #tpu.memory_space<vmem>>, vector<72x256xf32>
    %cst_42 = arith.constant dense<0.000000e+00> : vector<32x256xf32>
    %133 = tpu.matmul %131, %132, %cst_42 {dimension_numbers = #tpu.dot_dimension_numbers<[1], [0], [0], [1], [0, 0, 1, 1], [], []>} : vector<32x72xf32>, vector<72x256xf32>, vector<32x256xf32> -> vector<32x256xf32>
    %134 = arith.index_cast %0 : i32 to index
    %c0_43 = arith.constant 0 : index
    %c316 = arith.constant 316 : index
    %135 = vector.load %arg5[%134, %c0_43, %c316] : memref<2x8x912xf32, #tpu.memory_space<vmem>>, vector<1x8x256xf32>
    %136 = vector.shape_cast %135 : vector<1x8x256xf32> to vector<8x256xf32>
    %cst_44 = arith.constant 0.000000e+00 : f32
    %137 = vector.broadcast %cst_44 : f32 to vector<8x256xf32>
    %138 = vector.shape_cast %45 : vector<1x256xi1> to vector<1x256xi1>
    %139 = vector.broadcast %138 : vector<1x256xi1> to vector<8x256xi1>
    %140 = arith.select %139, %136, %137 : vector<8x256xi1>, vector<8x256xf32>
    %c0_45 = arith.constant 0 : index
    %c0_46 = arith.constant 0 : index
    %141 = vector.load %arg7[%c0_45, %c0_46] : memref<72x256xf32, #tpu.memory_space<vmem>>, vector<8x256xf32>
    tpu.vector_store %arg7[%c0_45, %c0_46], %140 {strides = array<i32>} : memref<72x256xf32, #tpu.memory_space<vmem>>, vector<8x256xf32>,
    %142 = arith.index_cast %0 : i32 to index
    %c0_47 = arith.constant 0 : index
    %c320 = arith.constant 320 : index
    %143 = vector.load %arg5[%142, %c0_47, %c320] : memref<2x8x912xf32, #tpu.memory_space<vmem>>, vector<1x8x256xf32>
    %144 = vector.shape_cast %143 : vector<1x8x256xf32> to vector<8x256xf32>
    %c8_48 = arith.constant 8 : index
    %c0_49 = arith.constant 0 : index
    %145 = vector.load %arg7[%c8_48, %c0_49] : memref<72x256xf32, #tpu.memory_space<vmem>>, vector<8x256xf32>
    tpu.vector_store %arg7[%c8_48, %c0_49], %144 {strides = array<i32>} : memref<72x256xf32, #tpu.memory_space<vmem>>, vector<8x256xf32>,
    %146 = arith.index_cast %0 : i32 to index
    %c0_50 = arith.constant 0 : index
    %c324 = arith.constant 324 : index
    %147 = vector.load %arg5[%146, %c0_50, %c324] : memref<2x8x912xf32, #tpu.memory_space<vmem>>, vector<1x8x256xf32>
    %148 = vector.shape_cast %147 : vector<1x8x256xf32> to vector<8x256xf32>
    %cst_51 = arith.constant 0.000000e+00 : f32
    %149 = vector.broadcast %cst_51 : f32 to vector<8x256xf32>
    %150 = vector.shape_cast %60 : vector<1x256xi1> to vector<1x256xi1>
    %151 = vector.broadcast %150 : vector<1x256xi1> to vector<8x256xi1>
    %152 = arith.select %151, %148, %149 : vector<8x256xi1>, vector<8x256xf32>
    %c16_52 = arith.constant 16 : index
    %c0_53 = arith.constant 0 : index
    %153 = vector.load %arg7[%c16_52, %c0_53] : memref<72x256xf32, #tpu.memory_space<vmem>>, vector<8x256xf32>
    tpu.vector_store %arg7[%c16_52, %c0_53], %152 {strides = array<i32>} : memref<72x256xf32, #tpu.memory_space<vmem>>, vector<8x256xf32>,
    %154 = arith.index_cast %0 : i32 to index
    %c0_54 = arith.constant 0 : index
    %c380 = arith.constant 380 : index
    %155 = vector.load %arg5[%154, %c0_54, %c380] : memref<2x8x912xf32, #tpu.memory_space<vmem>>, vector<1x8x256xf32>
    %156 = vector.shape_cast %155 : vector<1x8x256xf32> to vector<8x256xf32>
    %cst_55 = arith.constant 0.000000e+00 : f32
    %157 = vector.broadcast %cst_55 : f32 to vector<8x256xf32>
    %158 = vector.shape_cast %45 : vector<1x256xi1> to vector<1x256xi1>
    %159 = vector.broadcast %158 : vector<1x256xi1> to vector<8x256xi1>
    %160 = arith.select %159, %156, %157 : vector<8x256xi1>, vector<8x256xf32>
    %c24_56 = arith.constant 24 : index
    %c0_57 = arith.constant 0 : index
    %161 = vector.load %arg7[%c24_56, %c0_57] : memref<72x256xf32, #tpu.memory_space<vmem>>, vector<8x256xf32>
    tpu.vector_store %arg7[%c24_56, %c0_57], %160 {strides = array<i32>} : memref<72x256xf32, #tpu.memory_space<vmem>>, vector<8x256xf32>,
    %162 = arith.index_cast %0 : i32 to index
    %c0_58 = arith.constant 0 : index
    %c388 = arith.constant 388 : index
    %163 = vector.load %arg5[%162, %c0_58, %c388] : memref<2x8x912xf32, #tpu.memory_space<vmem>>, vector<1x8x256xf32>
    %164 = vector.shape_cast %163 : vector<1x8x256xf32> to vector<8x256xf32>
    %cst_59 = arith.constant 0.000000e+00 : f32
    %165 = vector.broadcast %cst_59 : f32 to vector<8x256xf32>
    %166 = vector.shape_cast %60 : vector<1x256xi1> to vector<1x256xi1>
    %167 = vector.broadcast %166 : vector<1x256xi1> to vector<8x256xi1>
    %168 = arith.select %167, %164, %165 : vector<8x256xi1>, vector<8x256xf32>
    %c32_60 = arith.constant 32 : index
    %c0_61 = arith.constant 0 : index
    %169 = vector.load %arg7[%c32_60, %c0_61] : memref<72x256xf32, #tpu.memory_space<vmem>>, vector<8x256xf32>
    tpu.vector_store %arg7[%c32_60, %c0_61], %168 {strides = array<i32>} : memref<72x256xf32, #tpu.memory_space<vmem>>, vector<8x256xf32>,
    %170 = arith.index_cast %0 : i32 to index
    %c0_62 = arith.constant 0 : index
    %c444 = arith.constant 444 : index
    %171 = vector.load %arg5[%170, %c0_62, %c444] : memref<2x8x912xf32, #tpu.memory_space<vmem>>, vector<1x8x256xf32>
    %172 = vector.shape_cast %171 : vector<1x8x256xf32> to vector<8x256xf32>
    %cst_63 = arith.constant 0.000000e+00 : f32
    %173 = vector.broadcast %cst_63 : f32 to vector<8x256xf32>
    %174 = vector.shape_cast %45 : vector<1x256xi1> to vector<1x256xi1>
    %175 = vector.broadcast %174 : vector<1x256xi1> to vector<8x256xi1>
    %176 = arith.select %175, %172, %173 : vector<8x256xi1>, vector<8x256xf32>
    %c40_64 = arith.constant 40 : index
    %c0_65 = arith.constant 0 : index
    %177 = vector.load %arg7[%c40_64, %c0_65] : memref<72x256xf32, #tpu.memory_space<vmem>>, vector<8x256xf32>
    tpu.vector_store %arg7[%c40_64, %c0_65], %176 {strides = array<i32>} : memref<72x256xf32, #tpu.memory_space<vmem>>, vector<8x256xf32>,
    %178 = arith.index_cast %0 : i32 to index
    %c0_66 = arith.constant 0 : index
    %c448 = arith.constant 448 : index
    %179 = vector.load %arg5[%178, %c0_66, %c448] : memref<2x8x912xf32, #tpu.memory_space<vmem>>, vector<1x8x256xf32>
    %180 = vector.shape_cast %179 : vector<1x8x256xf32> to vector<8x256xf32>
    %c48_67 = arith.constant 48 : index
    %c0_68 = arith.constant 0 : index
    %181 = vector.load %arg7[%c48_67, %c0_68] : memref<72x256xf32, #tpu.memory_space<vmem>>, vector<8x256xf32>
    tpu.vector_store %arg7[%c48_67, %c0_68], %180 {strides = array<i32>} : memref<72x256xf32, #tpu.memory_space<vmem>>, vector<8x256xf32>,
    %182 = arith.index_cast %0 : i32 to index
    %c0_69 = arith.constant 0 : index
    %c452 = arith.constant 452 : index
    %183 = vector.load %arg5[%182, %c0_69, %c452] : memref<2x8x912xf32, #tpu.memory_space<vmem>>, vector<1x8x256xf32>
    %184 = vector.shape_cast %183 : vector<1x8x256xf32> to vector<8x256xf32>
    %cst_70 = arith.constant 0.000000e+00 : f32
    %185 = vector.broadcast %cst_70 : f32 to vector<8x256xf32>
    %186 = vector.shape_cast %60 : vector<1x256xi1> to vector<1x256xi1>
    %187 = vector.broadcast %186 : vector<1x256xi1> to vector<8x256xi1>
    %188 = arith.select %187, %184, %185 : vector<8x256xi1>, vector<8x256xf32>
    %c56_71 = arith.constant 56 : index
    %c0_72 = arith.constant 0 : index
    %189 = vector.load %arg7[%c56_71, %c0_72] : memref<72x256xf32, #tpu.memory_space<vmem>>, vector<8x256xf32>
    tpu.vector_store %arg7[%c56_71, %c0_72], %188 {strides = array<i32>} : memref<72x256xf32, #tpu.memory_space<vmem>>, vector<8x256xf32>,
    %c0_73 = arith.constant 0 : index
    %c72 = arith.constant 72 : index
    %190 = vector.load %arg6[%c0_73, %c72] : memref<32x264xf32, #tpu.memory_space<vmem>>, vector<32x64xf32>
    %c0_74 = arith.constant 0 : index
    %c0_75 = arith.constant 0 : index
    %191 = vector.load %arg7[%c0_74, %c0_75] : memref<72x256xf32, #tpu.memory_space<vmem>>, vector<64x256xf32>
    %cst_76 = arith.constant dense<0.000000e+00> : vector<32x256xf32>
    %192 = tpu.matmul %190, %191, %cst_76 {dimension_numbers = #tpu.dot_dimension_numbers<[1], [0], [0], [1], [0, 0, 1, 1], [], []>} : vector<32x64xf32>, vector<64x256xf32>, vector<32x256xf32> -> vector<32x256xf32>
    %193 = arith.addf %133, %192 : vector<32x256xf32>
    %194 = arith.index_cast %0 : i32 to index
    %c0_77 = arith.constant 0 : index
    %c248 = arith.constant 248 : index
    %195 = vector.load %arg5[%194, %c0_77, %c248] : memref<2x8x912xf32, #tpu.memory_space<vmem>>, vector<1x8x256xf32>
    %196 = vector.shape_cast %195 : vector<1x8x256xf32> to vector<8x256xf32>
    %cst_78 = arith.constant 0.000000e+00 : f32
    %197 = vector.broadcast %cst_78 : f32 to vector<8x256xf32>
    %198 = vector.shape_cast %40 : vector<1x256xi1> to vector<1x256xi1>
    %199 = vector.broadcast %198 : vector<1x256xi1> to vector<8x256xi1>
    %200 = arith.select %199, %196, %197 : vector<8x256xi1>, vector<8x256xf32>
    %c0_79 = arith.constant 0 : index
    %c0_80 = arith.constant 0 : index
    %201 = vector.load %arg7[%c0_79, %c0_80] : memref<72x256xf32, #tpu.memory_space<vmem>>, vector<8x256xf32>
    tpu.vector_store %arg7[%c0_79, %c0_80], %200 {strides = array<i32>} : memref<72x256xf32, #tpu.memory_space<vmem>>, vector<8x256xf32>,
    %202 = arith.index_cast %0 : i32 to index
    %c0_81 = arith.constant 0 : index
    %c256 = arith.constant 256 : index
    %203 = vector.load %arg5[%202, %c0_81, %c256] : memref<2x8x912xf32, #tpu.memory_space<vmem>>, vector<1x8x256xf32>
    %204 = vector.shape_cast %203 : vector<1x8x256xf32> to vector<8x256xf32>
    %c8_82 = arith.constant 8 : index
    %c0_83 = arith.constant 0 : index
    %205 = vector.load %arg7[%c8_82, %c0_83] : memref<72x256xf32, #tpu.memory_space<vmem>>, vector<8x256xf32>
    tpu.vector_store %arg7[%c8_82, %c0_83], %204 {strides = array<i32>} : memref<72x256xf32, #tpu.memory_space<vmem>>, vector<8x256xf32>,
    %206 = arith.index_cast %0 : i32 to index
    %c0_84 = arith.constant 0 : index
    %c264 = arith.constant 264 : index
    %207 = vector.load %arg5[%206, %c0_84, %c264] : memref<2x8x912xf32, #tpu.memory_space<vmem>>, vector<1x8x256xf32>
    %208 = vector.shape_cast %207 : vector<1x8x256xf32> to vector<8x256xf32>
    %cst_85 = arith.constant 0.000000e+00 : f32
    %209 = vector.broadcast %cst_85 : f32 to vector<8x256xf32>
    %210 = vector.shape_cast %65 : vector<1x256xi1> to vector<1x256xi1>
    %211 = vector.broadcast %210 : vector<1x256xi1> to vector<8x256xi1>
    %212 = arith.select %211, %208, %209 : vector<8x256xi1>, vector<8x256xf32>
    %c16_86 = arith.constant 16 : index
    %c0_87 = arith.constant 0 : index
    %213 = vector.load %arg7[%c16_86, %c0_87] : memref<72x256xf32, #tpu.memory_space<vmem>>, vector<8x256xf32>
    tpu.vector_store %arg7[%c16_86, %c0_87], %212 {strides = array<i32>} : memref<72x256xf32, #tpu.memory_space<vmem>>, vector<8x256xf32>,
    %214 = arith.index_cast %0 : i32 to index
    %c0_88 = arith.constant 0 : index
    %c376 = arith.constant 376 : index
    %215 = vector.load %arg5[%214, %c0_88, %c376] : memref<2x8x912xf32, #tpu.memory_space<vmem>>, vector<1x8x256xf32>
    %216 = vector.shape_cast %215 : vector<1x8x256xf32> to vector<8x256xf32>
    %cst_89 = arith.constant 0.000000e+00 : f32
    %217 = vector.broadcast %cst_89 : f32 to vector<8x256xf32>
    %218 = vector.shape_cast %40 : vector<1x256xi1> to vector<1x256xi1>
    %219 = vector.broadcast %218 : vector<1x256xi1> to vector<8x256xi1>
    %220 = arith.select %219, %216, %217 : vector<8x256xi1>, vector<8x256xf32>
    %c24_90 = arith.constant 24 : index
    %c0_91 = arith.constant 0 : index
    %221 = vector.load %arg7[%c24_90, %c0_91] : memref<72x256xf32, #tpu.memory_space<vmem>>, vector<8x256xf32>
    tpu.vector_store %arg7[%c24_90, %c0_91], %220 {strides = array<i32>} : memref<72x256xf32, #tpu.memory_space<vmem>>, vector<8x256xf32>,
    %222 = arith.index_cast %0 : i32 to index
    %c0_92 = arith.constant 0 : index
    %c392 = arith.constant 392 : index
    %223 = vector.load %arg5[%222, %c0_92, %c392] : memref<2x8x912xf32, #tpu.memory_space<vmem>>, vector<1x8x256xf32>
    %224 = vector.shape_cast %223 : vector<1x8x256xf32> to vector<8x256xf32>
    %cst_93 = arith.constant 0.000000e+00 : f32
    %225 = vector.broadcast %cst_93 : f32 to vector<8x256xf32>
    %226 = vector.shape_cast %65 : vector<1x256xi1> to vector<1x256xi1>
    %227 = vector.broadcast %226 : vector<1x256xi1> to vector<8x256xi1>
    %228 = arith.select %227, %224, %225 : vector<8x256xi1>, vector<8x256xf32>
    %c32_94 = arith.constant 32 : index
    %c0_95 = arith.constant 0 : index
    %229 = vector.load %arg7[%c32_94, %c0_95] : memref<72x256xf32, #tpu.memory_space<vmem>>, vector<8x256xf32>
    tpu.vector_store %arg7[%c32_94, %c0_95], %228 {strides = array<i32>} : memref<72x256xf32, #tpu.memory_space<vmem>>, vector<8x256xf32>,
    %230 = arith.index_cast %0 : i32 to index
    %c0_96 = arith.constant 0 : index
    %c504 = arith.constant 504 : index
    %231 = vector.load %arg5[%230, %c0_96, %c504] : memref<2x8x912xf32, #tpu.memory_space<vmem>>, vector<1x8x256xf32>
    %232 = vector.shape_cast %231 : vector<1x8x256xf32> to vector<8x256xf32>
    %cst_97 = arith.constant 0.000000e+00 : f32
    %233 = vector.broadcast %cst_97 : f32 to vector<8x256xf32>
    %234 = vector.shape_cast %40 : vector<1x256xi1> to vector<1x256xi1>
    %235 = vector.broadcast %234 : vector<1x256xi1> to vector<8x256xi1>
    %236 = arith.select %235, %232, %233 : vector<8x256xi1>, vector<8x256xf32>
    %c40_98 = arith.constant 40 : index
    %c0_99 = arith.constant 0 : index
    %237 = vector.load %arg7[%c40_98, %c0_99] : memref<72x256xf32, #tpu.memory_space<vmem>>, vector<8x256xf32>
    tpu.vector_store %arg7[%c40_98, %c0_99], %236 {strides = array<i32>} : memref<72x256xf32, #tpu.memory_space<vmem>>, vector<8x256xf32>,
    %238 = arith.index_cast %0 : i32 to index
    %c0_100 = arith.constant 0 : index
    %c512 = arith.constant 512 : index
    %239 = vector.load %arg5[%238, %c0_100, %c512] : memref<2x8x912xf32, #tpu.memory_space<vmem>>, vector<1x8x256xf32>
    %240 = vector.shape_cast %239 : vector<1x8x256xf32> to vector<8x256xf32>
    %c48_101 = arith.constant 48 : index
    %c0_102 = arith.constant 0 : index
    %241 = vector.load %arg7[%c48_101, %c0_102] : memref<72x256xf32, #tpu.memory_space<vmem>>, vector<8x256xf32>
    tpu.vector_store %arg7[%c48_101, %c0_102], %240 {strides = array<i32>} : memref<72x256xf32, #tpu.memory_space<vmem>>, vector<8x256xf32>,
    %242 = arith.index_cast %0 : i32 to index
    %c0_103 = arith.constant 0 : index
    %c520 = arith.constant 520 : index
    %243 = vector.load %arg5[%242, %c0_103, %c520] : memref<2x8x912xf32, #tpu.memory_space<vmem>>, vector<1x8x256xf32>
    %244 = vector.shape_cast %243 : vector<1x8x256xf32> to vector<8x256xf32>
    %cst_104 = arith.constant 0.000000e+00 : f32
    %245 = vector.broadcast %cst_104 : f32 to vector<8x256xf32>
    %246 = vector.shape_cast %65 : vector<1x256xi1> to vector<1x256xi1>
    %247 = vector.broadcast %246 : vector<1x256xi1> to vector<8x256xi1>
    %248 = arith.select %247, %244, %245 : vector<8x256xi1>, vector<8x256xf32>
    %c56_105 = arith.constant 56 : index
    %c0_106 = arith.constant 0 : index
    %249 = vector.load %arg7[%c56_105, %c0_106] : memref<72x256xf32, #tpu.memory_space<vmem>>, vector<8x256xf32>
    tpu.vector_store %arg7[%c56_105, %c0_106], %248 {strides = array<i32>} : memref<72x256xf32, #tpu.memory_space<vmem>>, vector<8x256xf32>,
    %c0_107 = arith.constant 0 : index
    %c136 = arith.constant 136 : index
    %250 = vector.load %arg6[%c0_107, %c136] : memref<32x264xf32, #tpu.memory_space<vmem>>, vector<32x64xf32>
    %c0_108 = arith.constant 0 : index
    %c0_109 = arith.constant 0 : index
    %251 = vector.load %arg7[%c0_108, %c0_109] : memref<72x256xf32, #tpu.memory_space<vmem>>, vector<64x256xf32>
    %cst_110 = arith.constant dense<0.000000e+00> : vector<32x256xf32>
    %252 = tpu.matmul %250, %251, %cst_110 {dimension_numbers = #tpu.dot_dimension_numbers<[1], [0], [0], [1], [0, 0, 1, 1], [], []>} : vector<32x64xf32>, vector<64x256xf32>, vector<32x256xf32> -> vector<32x256xf32>
    %253 = arith.addf %193, %252 : vector<32x256xf32>
    %254 = arith.index_cast %0 : i32 to index
    %c0_111 = arith.constant 0 : index
    %c112 = arith.constant 112 : index
    %255 = vector.load %arg5[%254, %c0_111, %c112] : memref<2x8x912xf32, #tpu.memory_space<vmem>>, vector<1x8x256xf32>
    %256 = vector.shape_cast %255 : vector<1x8x256xf32> to vector<8x256xf32>
    %cst_112 = arith.constant 0.000000e+00 : f32
    %257 = vector.broadcast %cst_112 : f32 to vector<8x256xf32>
    %258 = vector.shape_cast %35 : vector<1x256xi1> to vector<1x256xi1>
    %259 = vector.broadcast %258 : vector<1x256xi1> to vector<8x256xi1>
    %260 = arith.select %259, %256, %257 : vector<8x256xi1>, vector<8x256xf32>
    %c0_113 = arith.constant 0 : index
    %c0_114 = arith.constant 0 : index
    %261 = vector.load %arg7[%c0_113, %c0_114] : memref<72x256xf32, #tpu.memory_space<vmem>>, vector<8x256xf32>
    tpu.vector_store %arg7[%c0_113, %c0_114], %260 {strides = array<i32>} : memref<72x256xf32, #tpu.memory_space<vmem>>, vector<8x256xf32>,
    %262 = arith.index_cast %0 : i32 to index
    %c0_115 = arith.constant 0 : index
    %c128 = arith.constant 128 : index
    %263 = vector.load %arg5[%262, %c0_115, %c128] : memref<2x8x912xf32, #tpu.memory_space<vmem>>, vector<1x8x256xf32>
    %264 = vector.shape_cast %263 : vector<1x8x256xf32> to vector<8x256xf32>
    %c8_116 = arith.constant 8 : index
    %c0_117 = arith.constant 0 : index
    %265 = vector.load %arg7[%c8_116, %c0_117] : memref<72x256xf32, #tpu.memory_space<vmem>>, vector<8x256xf32>
    tpu.vector_store %arg7[%c8_116, %c0_117], %264 {strides = array<i32>} : memref<72x256xf32, #tpu.memory_space<vmem>>, vector<8x256xf32>,
    %266 = arith.index_cast %0 : i32 to index
    %c0_118 = arith.constant 0 : index
    %c144 = arith.constant 144 : index
    %267 = vector.load %arg5[%266, %c0_118, %c144] : memref<2x8x912xf32, #tpu.memory_space<vmem>>, vector<1x8x256xf32>
    %268 = vector.shape_cast %267 : vector<1x8x256xf32> to vector<8x256xf32>
    %cst_119 = arith.constant 0.000000e+00 : f32
    %269 = vector.broadcast %cst_119 : f32 to vector<8x256xf32>
    %270 = vector.shape_cast %70 : vector<1x256xi1> to vector<1x256xi1>
    %271 = vector.broadcast %270 : vector<1x256xi1> to vector<8x256xi1>
    %272 = arith.select %271, %268, %269 : vector<8x256xi1>, vector<8x256xf32>
    %c16_120 = arith.constant 16 : index
    %c0_121 = arith.constant 0 : index
    %273 = vector.load %arg7[%c16_120, %c0_121] : memref<72x256xf32, #tpu.memory_space<vmem>>, vector<8x256xf32>
    tpu.vector_store %arg7[%c16_120, %c0_121], %272 {strides = array<i32>} : memref<72x256xf32, #tpu.memory_space<vmem>>, vector<8x256xf32>,
    %274 = arith.index_cast %0 : i32 to index
    %c0_122 = arith.constant 0 : index
    %c368 = arith.constant 368 : index
    %275 = vector.load %arg5[%274, %c0_122, %c368] : memref<2x8x912xf32, #tpu.memory_space<vmem>>, vector<1x8x256xf32>
    %276 = vector.shape_cast %275 : vector<1x8x256xf32> to vector<8x256xf32>
    %cst_123 = arith.constant 0.000000e+00 : f32
    %277 = vector.broadcast %cst_123 : f32 to vector<8x256xf32>
    %278 = vector.shape_cast %35 : vector<1x256xi1> to vector<1x256xi1>
    %279 = vector.broadcast %278 : vector<1x256xi1> to vector<8x256xi1>
    %280 = arith.select %279, %276, %277 : vector<8x256xi1>, vector<8x256xf32>
    %c24_124 = arith.constant 24 : index
    %c0_125 = arith.constant 0 : index
    %281 = vector.load %arg7[%c24_124, %c0_125] : memref<72x256xf32, #tpu.memory_space<vmem>>, vector<8x256xf32>
    tpu.vector_store %arg7[%c24_124, %c0_125], %280 {strides = array<i32>} : memref<72x256xf32, #tpu.memory_space<vmem>>, vector<8x256xf32>,
    %282 = arith.index_cast %0 : i32 to index
    %c0_126 = arith.constant 0 : index
    %c400 = arith.constant 400 : index
    %283 = vector.load %arg5[%282, %c0_126, %c400] : memref<2x8x912xf32, #tpu.memory_space<vmem>>, vector<1x8x256xf32>
    %284 = vector.shape_cast %283 : vector<1x8x256xf32> to vector<8x256xf32>
    %cst_127 = arith.constant 0.000000e+00 : f32
    %285 = vector.broadcast %cst_127 : f32 to vector<8x256xf32>
    %286 = vector.shape_cast %70 : vector<1x256xi1> to vector<1x256xi1>
    %287 = vector.broadcast %286 : vector<1x256xi1> to vector<8x256xi1>
    %288 = arith.select %287, %284, %285 : vector<8x256xi1>, vector<8x256xf32>
    %c32_128 = arith.constant 32 : index
    %c0_129 = arith.constant 0 : index
    %289 = vector.load %arg7[%c32_128, %c0_129] : memref<72x256xf32, #tpu.memory_space<vmem>>, vector<8x256xf32>
    tpu.vector_store %arg7[%c32_128, %c0_129], %288 {strides = array<i32>} : memref<72x256xf32, #tpu.memory_space<vmem>>, vector<8x256xf32>,
    %290 = arith.index_cast %0 : i32 to index
    %c0_130 = arith.constant 0 : index
    %c624 = arith.constant 624 : index
    %291 = vector.load %arg5[%290, %c0_130, %c624] : memref<2x8x912xf32, #tpu.memory_space<vmem>>, vector<1x8x256xf32>
    %292 = vector.shape_cast %291 : vector<1x8x256xf32> to vector<8x256xf32>
    %cst_131 = arith.constant 0.000000e+00 : f32
    %293 = vector.broadcast %cst_131 : f32 to vector<8x256xf32>
    %294 = vector.shape_cast %35 : vector<1x256xi1> to vector<1x256xi1>
    %295 = vector.broadcast %294 : vector<1x256xi1> to vector<8x256xi1>
    %296 = arith.select %295, %292, %293 : vector<8x256xi1>, vector<8x256xf32>
    %c40_132 = arith.constant 40 : index
    %c0_133 = arith.constant 0 : index
    %297 = vector.load %arg7[%c40_132, %c0_133] : memref<72x256xf32, #tpu.memory_space<vmem>>, vector<8x256xf32>
    tpu.vector_store %arg7[%c40_132, %c0_133], %296 {strides = array<i32>} : memref<72x256xf32, #tpu.memory_space<vmem>>, vector<8x256xf32>,
    %298 = arith.index_cast %0 : i32 to index
    %c0_134 = arith.constant 0 : index
    %c640 = arith.constant 640 : index
    %299 = vector.load %arg5[%298, %c0_134, %c640] : memref<2x8x912xf32, #tpu.memory_space<vmem>>, vector<1x8x256xf32>
    %300 = vector.shape_cast %299 : vector<1x8x256xf32> to vector<8x256xf32>
    %c48_135 = arith.constant 48 : index
    %c0_136 = arith.constant 0 : index
    %301 = vector.load %arg7[%c48_135, %c0_136] : memref<72x256xf32, #tpu.memory_space<vmem>>, vector<8x256xf32>
    tpu.vector_store %arg7[%c48_135, %c0_136], %300 {strides = array<i32>} : memref<72x256xf32, #tpu.memory_space<vmem>>, vector<8x256xf32>,
    %302 = arith.index_cast %0 : i32 to index
    %c0_137 = arith.constant 0 : index
    %c656 = arith.constant 656 : index
    %303 = vector.load %arg5[%302, %c0_137, %c656] : memref<2x8x912xf32, #tpu.memory_space<vmem>>, vector<1x8x256xf32>
    %304 = vector.shape_cast %303 : vector<1x8x256xf32> to vector<8x256xf32>
    %cst_138 = arith.constant 0.000000e+00 : f32
    %305 = vector.broadcast %cst_138 : f32 to vector<8x256xf32>
    %306 = vector.shape_cast %70 : vector<1x256xi1> to vector<1x256xi1>
    %307 = vector.broadcast %306 : vector<1x256xi1> to vector<8x256xi1>
    %308 = arith.select %307, %304, %305 : vector<8x256xi1>, vector<8x256xf32>
    %c56_139 = arith.constant 56 : index
    %c0_140 = arith.constant 0 : index
    %309 = vector.load %arg7[%c56_139, %c0_140] : memref<72x256xf32, #tpu.memory_space<vmem>>, vector<8x256xf32>
    tpu.vector_store %arg7[%c56_139, %c0_140], %308 {strides = array<i32>} : memref<72x256xf32, #tpu.memory_space<vmem>>, vector<8x256xf32>,
    %c0_141 = arith.constant 0 : index
    %c200 = arith.constant 200 : index
    %310 = vector.load %arg6[%c0_141, %c200] : memref<32x264xf32, #tpu.memory_space<vmem>>, vector<32x64xf32>
    %c0_142 = arith.constant 0 : index
    %c0_143 = arith.constant 0 : index
    %311 = vector.load %arg7[%c0_142, %c0_143] : memref<72x256xf32, #tpu.memory_space<vmem>>, vector<64x256xf32>
    %cst_144 = arith.constant dense<0.000000e+00> : vector<32x256xf32>
    %312 = tpu.matmul %310, %311, %cst_144 {dimension_numbers = #tpu.dot_dimension_numbers<[1], [0], [0], [1], [0, 0, 1, 1], [], []>} : vector<32x64xf32>, vector<64x256xf32>, vector<32x256xf32> -> vector<32x256xf32>
    %313 = arith.addf %253, %312 : vector<32x256xf32>
    %c0_145 = arith.constant 0 : index
    %c0_146 = arith.constant 0 : index
    %314 = vector.load %arg3[%c0_145, %c0_146] : memref<32x1xf32, #tpu.memory_space<vmem>>, vector<32x1xf32>
    %315 = vector.broadcast %314 : vector<32x1xf32> to vector<32x256xf32>
    %316 = arith.addf %313, %315 : vector<32x256xf32>
    %c0_147 = arith.constant 0 : index
    %c0_148 = arith.constant 0 : index
    %c0_149 = arith.constant 0 : index
    %317 = vector.load %arg4[%c0_147, %c0_148, %c0_149] : memref<1x32x256xf32, #tpu.memory_space<vmem>>, vector<1x32x256xf32>
    %318 = vector.shape_cast %317 : vector<1x32x256xf32> to vector<32x256xf32>
    %319 = vector.shape_cast %316 : vector<32x256xf32> to vector<1x32x256xf32>
    tpu.vector_store %arg4[%c0_147, %c0_148, %c0_149], %319 {strides = array<i32>} : memref<1x32x256xf32, #tpu.memory_space<vmem>>, vector<1x32x256xf32>,
    return
  }
  func.func @transform_2(%arg0: i32) -> (i32, i32) {
    %c0_i32 = arith.constant 0 : i32
    %c0_i32_0 = arith.constant 0 : i32
    %c0_i32_1 = arith.constant 0 : i32
    return %c0_i32, %c0_i32_0 : i32, i32
  }
  func.func @transform_3(%arg0: i32) -> (i32, i32, i32) {
    %c0_i32 = arith.constant 0 : i32
    %c0_i32_0 = arith.constant 0 : i32
    %c0_i32_1 = arith.constant 0 : i32
    return %arg0, %c0_i32, %c0_i32_0 : i32, i32, i32
  }
}

</mosaic_0001>

<llo_original>
// kernel: tpu_custom_call.1
$region0: #{tpu_custom_call.1}
  #allocation0 [shape = 'u32[]', space=smem, size = 0x4, offset = 0x4, fixed_abs, tag = 'smem constant byte address 0x4 - core index']
  #allocation1 [shape = 'u32[72,128]{1,0:T(1,128)}', space=vmem, size = 0x9000, scoped, tag = 'internal scratch']
  #allocation2 [shape = 'f32[2,8,912]{2,1,0:T(8,128)}', space=vmem, size = 0x10000, scoped, tag = 'scratch operand']
  #allocation3 [shape = 'f32[32,264]{1,0:T(8,128)}', space=vmem, size = 0xc000, scoped, tag = 'scratch operand']
  #allocation4 [shape = 'f32[72,256]{1,0:T(8,128)}', space=vmem, size = 0x12000, scoped, tag = 'scratch operand']
  #allocation5 [shape = 's32[2]{0}', space=sflag, size = 0x8, scoped, tag = 'scratch operand']
  #allocation6 [shape = 's32[1]{0}', space=sflag, size = 0x4, scoped, tag = 'scratch operand']
  #allocation9 [shape = 's32[]', space=sflag, size = 0x4, offset = 0, fixed_abs, tag = 'sflag constant byte address 0x0 - dummy sync flag']
  #allocation10 [shape = 's32[]', space=sflag, size = 0x4, offset = 0, fixed_abs, tag = 'sflag constant byte address 0x0 - dummy sync flag']
  #allocation11 [shape = 'u32[]', space=smem, size = 0x4, offset = 0x44, fixed_abs, tag = 'smem constant byte address 0x44 - assertion arg 0']
  #allocation12 [shape = 'u32[]', space=smem, size = 0x4, offset = 0x48, fixed_abs, tag = 'smem constant byte address 0x48 - assertion arg 1']
  #allocation13 [shape = 's32[]', space=sflag, size = 0x4, offset = 0, fixed_abs, tag = 'sflag constant byte address 0x0 - dummy sync flag']
  #allocation14 [shape = 's32[]', space=sflag, size = 0x4, offset = 0, fixed_abs, tag = 'sflag constant byte address 0x0 - dummy sync flag']
  %s0 = inlined_call_operand.vmem [shape: f32[2,8,256], index: 0, kind: input, shape index: {}]
  %s1 = inlined_call_operand.hbm [shape: f32[32,264], index: 1, kind: input, shape index: {}]
  %s2 = inlined_call_operand.vmem [shape: f32[32,1], index: 2, kind: input, shape index: {}]
  %s3 = inlined_call_operand.hbm [shape: f32[2,32,256], index: 3, kind: output, shape index: {}]
  %s4 = sld [smem:[#allocation0]]
  $region87: #{tpu_custom_call.1} parent=0
    _
  %s6 = ssub.s32 1, %s4
  %s7 = scalar_select 0, %s6, %s4
  $region1: #{tpu_custom_call.1} parent=0
    #allocation7 [shape = 'u8[65536]{0}', space=vmem, size = 0x10000, scoped, tag = 'output window, operand 0']
    #allocation8 [shape = 's32[2]{0}', space=sflag, size = 0x8, scoped, tag = 'scoped memory for tpu_custom_call.1']
    %8 = vsyncpa [#allocation8], 0
    %s9 = scalar_lea.sflag [#allocation8], 1
    %10 = vsyncpa %s9, 0
    loop: start=0, step=1, limit=4
    $region2: #{tpu_custom_call.1} parent=1 // loop_pre_header
      _
    $region3: #{tpu_custom_call.1} parent=1 // loop_header
      %s12 = sphi 0, %s16
      %p13 = scmp.ge.s32.totalorder %s12, 4
      %s20 = sphi 0, %s20
      %s22 = sphi 0, %s20
      %s23 = sphi 0, %s22
      %s37 = sphi 0, %s23
      %s43 = sphi 0, %s45
      %s46 = sphi 0, %s43
      %s47 = sphi 0, %s46
      %s63 = sphi 0, %s47
    $region4: #{tpu_custom_call.1} parent=1 // loop_header_branch
      %15 = sbr.rel (%p13) target = $region8
    $region5: #{tpu_custom_call.1} parent=1 // loop_body
      %s17 = ssub.s32 %s12, 1
      %s18 = ssub.s32 %s12, 2
      %s19 = sadd.s32 %s12, 1
      %s21 = sadd.s32 %s20, 1
      %p24 = scmp.eq.s32.totalorder %s12, 1
      %p25 = scmp.ne.s32.totalorder %s20, %s22
      %p26 = scmp.eq.s32.totalorder %s12, 0
      %p27 = por %p25, %p26
      %p28 = scmp.ne.s32.totalorder %s20, %s22
      %p29 = scmp.eq.s32.totalorder %s17, 1
      %p30 = por %p28, %p29
      %p31 = scmp.ne.s32.totalorder %s22, %s23
      %p32 = scmp.eq.s32.totalorder %s17, 0
      %p33 = por %p31, %p32
      %p34 = scmp.ne.s32.totalorder %s22, %s23
      %p35 = scmp.eq.s32.totalorder %s18, 1
      %p36 = por %p34, %p35
      %p38 = scmp.ne.s32.totalorder %s23, %s37
      %p39 = scmp.eq.s32.totalorder %s18, 0
      %p40 = por %p38, %p39
      %s41 = ssub.s32 %s12, %s19
      %p42 = scmp.eq.s32.totalorder %s41, 0
      %s44 = sadd.s32 %s43, 1
      %s45 = scalar_select %p42, %s43, %s44
      %p48 = pneg %p42
      %p49 = scmp.eq.s32.totalorder %s12, 1
      %p50 = por %p48, %p49
      %p51 = scmp.ne.s32.totalorder %s43, %s46
      %p52 = scmp.eq.s32.totalorder %s12, 0
      %p53 = por %p51, %p52
      %p54 = scmp.ne.s32.totalorder %s43, %s46
      %p55 = scmp.eq.s32.totalorder %s17, 1
      %p56 = por %p54, %p55
      %p57 = scmp.ne.s32.totalorder %s46, %s47
      %p58 = scmp.eq.s32.totalorder %s17, 0
      %p59 = por %p57, %p58
      %p60 = scmp.ne.s32.totalorder %s46, %s47
      %p61 = scmp.eq.s32.totalorder %s18, 1
      %p62 = por %p60, %p61
      %p64 = scmp.ne.s32.totalorder %s47, %s63
      %p65 = scmp.eq.s32.totalorder %s18, 0
      %p66 = por %p64, %p65
      %p67 = scmp.le.s32.totalorder 1, %s12
      %p68 = scmp.lt.s32.totalorder %s12, 3
      %p69 = pnand %p67, %p68
      %p70 = pneg %p69
      // Predicated region
      $region9: #{tpu_custom_call.1} parent=5 // pred_check
        _
      $region10: #{tpu_custom_call.1} parent=5 // pred_check_branch
        %72 = sbr.rel (%p69) target = $region12
      $region11: #{tpu_custom_call.1} parent=5 // pred_region
        %s73 = ssub.s32 %s12, 1
        // Predicated region
        $region13: #{tpu_custom_call.1} parent=11 // pred_check
          %p74 = pneg %p33
        $region14: #{tpu_custom_call.1} parent=11 // pred_check_branch
          %76 = sbr.rel (%p74) target = $region16
        $region15: #{tpu_custom_call.1} parent=11 // pred_region
          _
        $region16: #{tpu_custom_call.1} parent=11 // pred_fallthru
          _
      $region12: #{tpu_custom_call.1} parent=5 // pred_fallthru
        _
      %p77 = scmp.lt.s32.totalorder %s12, 2
      // Predicated region
      $region17: #{tpu_custom_call.1} parent=5 // pred_check
        %p78 = pneg %p77
      $region18: #{tpu_custom_call.1} parent=5 // pred_check_branch
        %80 = sbr.rel (%p78) target = $region20
      $region19: #{tpu_custom_call.1} parent=5 // pred_region
        _
      $region20: #{tpu_custom_call.1} parent=5 // pred_fallthru
        _
      %p81 = scmp.le.s32.totalorder 1, %s12
      %p82 = scmp.lt.s32.totalorder %s12, 3
      %p83 = pnand %p81, %p82
      %p84 = pneg %p83
      // Predicated region
      $region21: #{tpu_custom_call.1} parent=5 // pred_check
        _
      $region22: #{tpu_custom_call.1} parent=5 // pred_check_branch
        %86 = sbr.rel (%p83) target = $region24
      $region23: #{tpu_custom_call.1} parent=5 // pred_region
        %s87 = ssub.s32 %s12, 1
        %p88 = pneg %p33
        %p89 = pneg %p30
        %p90 = pneg %p59
        %p91 = pneg %p56
        %s92 = sand.u32 %s46, 1
        %s93 = scalar_lea.sflag [#allocation8], %s92
        %s94 = sand.u32 %s46, 1
        %s95 = smul.addr %s94, 64
        %s96 = scalar_lea.vmem [#allocation7], %s95
        %p97 = scmp.lt.s32.totalorder %s17, 0
        %s98 = ssub.s32 0, %s17
        %s99 = scalar_select %p97, %s98, %s17
        %s100 = sand.u32 %s99, 1
        %s101 = ssub.s32 0, %s100
        %s102 = scalar_select %p97, %s101, %s100
        %p103 = scmp.eq.s32.totalorder %s17, 0
        // Predicated region
        $region25: #{tpu_custom_call.1} parent=23 // pred_check
          %p104 = pneg %p103
        $region26: #{tpu_custom_call.1} parent=23 // pred_check_branch
          %106 = sbr.rel (%p104) target = $region28
        $region27: #{tpu_custom_call.1} parent=23 // pred_region
          // Predicated region
          $region29: #{tpu_custom_call.1} parent=27 // pred_check
            _
          $region30: #{tpu_custom_call.1} parent=27 // pred_check_branch
            %108 = sbr.rel target = $region32
          $region31: #{tpu_custom_call.1} parent=27 // pred_region
            %109 = sst [smem:[#allocation11]] [#allocation10]
            %110 = sst [smem:[#allocation12]] [#allocation9]
          $region32: #{tpu_custom_call.1} parent=27 // pred_fallthru
            _
          %112 = shalt.err (0)
          %s114 = sshll.u32 %s1, 4
          %s115 = int_to_ptr.hbm [resolvable:$true] %s114
          %s116 = sshll.u32 [#allocation3], 4
          %s117 = int_to_ptr.vmem [resolvable:$true] %s116
          %119 = dma.hbm_to_vmem [thread:$0]  %s115, 1536, %s117, [#allocation6]
          %120 = vst [vmem:[#allocation2] sm:$0xff] 0.0
          %121 = vst [vmem:[#allocation2 + $0x8] sm:$0xff] 0.0
          %122 = vst [vmem:[#allocation2 + $0x10] sm:$0xff] 0.0
          %123 = vst [vmem:[#allocation2 + $0x40] sm:$0xff] 0.0
          %124 = vst [vmem:[#allocation2 + $0x48] sm:$0xff] 0.0
          %125 = vst [vmem:[#allocation2 + $0x50] sm:$0xff] 0.0
          %126 = vst [vmem:[#allocation2 + $0x28] sm:$0xff] 0.0
          %127 = vst [vmem:[#allocation2 + $0x30] sm:$0xff] 0.0
          %vm128 = vcmask 130048
          %129 = vst.msk [vmem:[#allocation2 + $0x38] sm:$0xff] %vm128, 0.0
          %130 = vst [vmem:[#allocation2 + $0x68] sm:$0xff] 0.0
          %131 = vst [vmem:[#allocation2 + $0x70] sm:$0xff] 0.0
          %132 = vst.msk [vmem:[#allocation2 + $0x78] sm:$0xff] %vm128, 0.0
          %s133 = scalar_lea.vmem [#allocation2], 24
          // Predicated region
          $region33: #{tpu_custom_call.1} parent=27 // pred_check
            _
          $region34: #{tpu_custom_call.1} parent=27 // pred_check_branch
            %135 = sbr.rel (0) target = $region36
          $region35: #{tpu_custom_call.1} parent=27 // pred_region
            loop: start=0, step=1, limit=1
            $region37: #{tpu_custom_call.1} parent=35 // loop_pre_header
              _
            $region38: #{tpu_custom_call.1} parent=35 // loop_header
              %s137 = sphi 0, %s141
              %p138 = scmp.ge.s32.totalorder %s137, 1
              %s142 = sphi %s0, %s0
              %s143 = sphi %s133, %s133
            $region39: #{tpu_custom_call.1} parent=35 // loop_header_branch
              %140 = sbr.rel (%p138) target = $region43
            $region40: #{tpu_custom_call.1} parent=35 // loop_body
              %v144 = vld [vmem:[%s142] sm:$0xff]
              %145 = vst [vmem:[%s143] sm:$0xff] %v144
              %v146 = vld [vmem:[%s142 + $0x8] sm:$0xff]
              %147 = vst [vmem:[%s143 + $0x8] sm:$0xff] %v146
            $region41: #{tpu_custom_call.1} parent=35 // loop_footer
              %s141 = sadd.s32 1, %s137
            $region42: #{tpu_custom_call.1} parent=35 // loop_footer_branch
              %136 = sbr.rel target = $region38
            $region43: #{tpu_custom_call.1} parent=35 // loop_exit
              _
          $region36: #{tpu_custom_call.1} parent=27 // pred_fallthru
            _
          // Predicated region
          $region44: #{tpu_custom_call.1} parent=27 // pred_check
            _
          $region45: #{tpu_custom_call.1} parent=27 // pred_check_branch
            %149 = sbr.rel target = $region47
          $region46: #{tpu_custom_call.1} parent=27 // pred_region
            _
          $region47: #{tpu_custom_call.1} parent=27 // pred_fallthru
            _
          // Predicated region
          $region48: #{tpu_custom_call.1} parent=27 // pred_check
            _
          $region49: #{tpu_custom_call.1} parent=27 // pred_check_branch
            %152 = sbr.rel (0) target = $region51
          $region50: #{tpu_custom_call.1} parent=27 // pred_region
            %153 = vsyncadd [#allocation5], 256
          $region51: #{tpu_custom_call.1} parent=27 // pred_fallthru
            _
          %s154 = smul.u32 8, 4
          %s155 = smul.u32 %s154, 3
          %s156 = sshll.u32 %s155, 4
          %157 = dma.done [#allocation6], %s156
        $region28: #{tpu_custom_call.1} parent=23 // pred_fallthru
          _
        %s158 = scalar_lea.sflag [#allocation5], %s102
        %s159 = smul.u32 8, 1
        %s160 = smul.u32 %s159, 2
        %s161 = sshll.u32 %s160, 4
        %162 = dma.done %s158, %s161
        %s163 = sadd.s32 %s17, 1
        %p164 = scmp.lt.s32.totalorder %s163, 2
        // Predicated region
        $region52: #{tpu_custom_call.1} parent=23 // pred_check
          %p165 = pneg %p164
        $region53: #{tpu_custom_call.1} parent=23 // pred_check_branch
          %167 = sbr.rel (%p165) target = $region55
        $region54: #{tpu_custom_call.1} parent=23 // pred_region
          %s168 = ssub.s32 1, %s102
          %s169 = smul.u32 %s163, 2
          %s170 = smul.addr %s169, 8
          %s171 = scalar_lea.vmem %s0, %s170
          %s172 = smul.u32 %s168, 8
          %s173 = sadd.s32 3, %s172
          %s174 = smul.addr %s173, 8
          %s175 = scalar_lea.vmem [#allocation2], %s174
          %s176 = scalar_lea.sflag [#allocation5], %s168
          // Predicated region
          $region56: #{tpu_custom_call.1} parent=54 // pred_check
            _
          $region57: #{tpu_custom_call.1} parent=54 // pred_check_branch
            %178 = sbr.rel (0) target = $region59
          $region58: #{tpu_custom_call.1} parent=54 // pred_region
            loop: start=0, step=1, limit=1
            $region60: #{tpu_custom_call.1} parent=58 // loop_pre_header
              _
            $region61: #{tpu_custom_call.1} parent=58 // loop_header
              %s180 = sphi 0, %s184
              %p181 = scmp.ge.s32.totalorder %s180, 1
              %s185 = sphi %s171, %s171
              %s186 = sphi %s175, %s175
            $region62: #{tpu_custom_call.1} parent=58 // loop_header_branch
              %183 = sbr.rel (%p181) target = $region66
            $region63: #{tpu_custom_call.1} parent=58 // loop_body
              %v187 = vld [vmem:[%s185] sm:$0xff]
              %188 = vst [vmem:[%s186] sm:$0xff] %v187
              %v189 = vld [vmem:[%s185 + $0x8] sm:$0xff]
              %190 = vst [vmem:[%s186 + $0x8] sm:$0xff] %v189
            $region64: #{tpu_custom_call.1} parent=58 // loop_footer
              %s184 = sadd.s32 1, %s180
            $region65: #{tpu_custom_call.1} parent=58 // loop_footer_branch
              %179 = sbr.rel target = $region61
            $region66: #{tpu_custom_call.1} parent=58 // loop_exit
              _
          $region59: #{tpu_custom_call.1} parent=54 // pred_fallthru
            _
          // Predicated region
          $region67: #{tpu_custom_call.1} parent=54 // pred_check
            _
          $region68: #{tpu_custom_call.1} parent=54 // pred_check_branch
            %192 = sbr.rel target = $region70
          $region69: #{tpu_custom_call.1} parent=54 // pred_region
            _
          $region70: #{tpu_custom_call.1} parent=54 // pred_fallthru
            _
          // Predicated region
          $region71: #{tpu_custom_call.1} parent=54 // pred_check
            _
          $region72: #{tpu_custom_call.1} parent=54 // pred_check_branch
            %195 = sbr.rel (0) target = $region74
          $region73: #{tpu_custom_call.1} parent=54 // pred_region
            %196 = vsyncadd %s176, 256
          $region74: #{tpu_custom_call.1} parent=54 // pred_fallthru
            _
        $region55: #{tpu_custom_call.1} parent=23 // pred_fallthru
          _
        %v197 = vlaneseq
        %v198 = vand.u32 %v197, 127
        %v199 = vadd.s32 %v198, 128
        %vm200 = vcmp.lt.s32.totalorder %v198, 0
        %v201 = vsub.s32 0, %v198
        %v202 = vsel %vm200, %v201, %v198
        %v203 = vshrl.u32 %v202, 4
        %v204 = vand.u32 %v202, 15
        %v205 = vsub.s32 0, %v204
        %v206 = vsel %vm200, %v205, %v204
        %vm207 = vcmp.lt.s32.totalorder %v199, 0
        %v208 = vsub.s32 0, %v199
        %v209 = vsel %vm207, %v208, %v199
        %v210 = vshrl.u32 %v209, 4
        %v211 = vand.u32 %v209, 15
        %v212 = vsub.s32 0, %v211
        %v213 = vsel %vm207, %v212, %v211
        %vm214 = vcmp.ne.s32.totalorder %v206, 0
        %vm215 = vcmp.ne.s32.totalorder %v213, 0
        %vm216 = vcmp.lt.s32.totalorder %v206, 0
        %vm217 = vcmp.lt.s32.totalorder %v213, 0
        %vm218 = vmand %vm216, %vm214
        %vm219 = vmand %vm217, %vm215
        %v220 = vadd.s32 %v206, 16
        %v221 = vadd.s32 %v213, 16
        %v222 = vsel %vm218, %v220, %v206
        %v223 = vsel %vm219, %v221, %v213
        %vm224 = vcmp.ge.s32.totalorder %v222, 16
        %vm225 = vcmp.ge.s32.totalorder %v223, 16
        %vm226 = vcmp.lt.s32.totalorder %v222, 32
        %vm227 = vcmp.lt.s32.totalorder %v223, 32
        %vm228 = vmand %vm224, %vm226
        %vm229 = vmand %vm225, %vm227
        %vm230 = vcmp.ge.s32.totalorder %v222, 8
        %vm231 = vcmp.ge.s32.totalorder %v223, 8
        %vm232 = vcmp.lt.s32.totalorder %v222, 24
        %vm233 = vcmp.lt.s32.totalorder %v223, 24
        %vm234 = vmand %vm230, %vm232
        %vm235 = vmand %vm231, %vm233
        %vm236 = vcmp.ge.s32.totalorder %v222, 4
        %vm237 = vcmp.ge.s32.totalorder %v223, 4
        %vm238 = vcmp.lt.s32.totalorder %v222, 20
        %vm239 = vcmp.lt.s32.totalorder %v223, 20
        %vm240 = vmand %vm236, %vm238
        %vm241 = vmand %vm237, %vm239
        %vm242 = vcmp.ge.s32.totalorder %v222, 2
        %vm243 = vcmp.ge.s32.totalorder %v223, 2
        %vm244 = vcmp.lt.s32.totalorder %v222, 18
        %vm245 = vcmp.lt.s32.totalorder %v223, 18
        %vm246 = vmand %vm242, %vm244
        %vm247 = vmand %vm243, %vm245
        %vm248 = vcmp.ge.s32.totalorder %v222, 4294967294
        %vm249 = vcmp.ge.s32.totalorder %v223, 4294967294
        %vm250 = vcmp.lt.s32.totalorder %v222, 14
        %vm251 = vcmp.lt.s32.totalorder %v223, 14
        %vm252 = vmand %vm248, %vm250
        %vm253 = vmand %vm249, %vm251
        %vm254 = vcmp.ge.s32.totalorder %v222, 4294967292
        %vm255 = vcmp.ge.s32.totalorder %v223, 4294967292
        %vm256 = vcmp.lt.s32.totalorder %v222, 12
        %vm257 = vcmp.lt.s32.totalorder %v223, 12
        %vm258 = vmand %vm254, %vm256
        %vm259 = vmand %vm255, %vm257
        %vm260 = vcmp.ge.s32.totalorder %v222, 4294967288
        %vm261 = vcmp.ge.s32.totalorder %v223, 4294967288
        %vm262 = vcmp.lt.s32.totalorder %v222, 8
        %vm263 = vcmp.lt.s32.totalorder %v223, 8
        %vm264 = vmand %vm260, %vm262
        %vm265 = vmand %vm261, %vm263
        %vm266 = vcmp.ge.s32.totalorder %v222, 4294967280
        %vm267 = vcmp.ge.s32.totalorder %v223, 4294967280
        %vm268 = vcmp.lt.s32.totalorder %v222, 0
        %vm269 = vcmp.lt.s32.totalorder %v223, 0
        %vm270 = vmand %vm266, %vm268
        %vm271 = vmand %vm267, %vm269
        %s272 = smul.u32 %s102, 8
        %s273 = smul.addr %s272, 8
        %s274 = scalar_lea.vmem [#allocation2], %s273
        %v275 = vld [vmem:[%s274 + $0x18] sm:$0xff]
        %v276 = vld [vmem:[%s274 + $0x20] sm:$0xff]
        %277 = vst [vmem:[#allocation4] sm:$0xff] %v275
        %278 = vst [vmem:[#allocation4 + $0x8] sm:$0xff] %v276
        %v279 = vld [vmem:[%s274 + $0x10] sm:$0xff]
        %v280 = vld [vmem:[%s274 + $0x18] sm:$0xff]
        %v281 = vld [vmem:[%s274 + $0x20] sm:$0xff]
        %v282 = vsel %vm246, 1, 0
        %v283 = vsel %vm247, 1, 0
        %vm284 = vcmp.eq.s32.totalorder %v282, 1
        %vm285 = vcmp.eq.s32.totalorder %v283, 1
        %289 = vrot.lane.b32.xlu0 %v279, 34
        %v290 = vpop.permute.xlu0 %289
        %291 = vrot.lane.b32.xlu0 %v280, 34
        %v292 = vpop.permute.xlu0 %291
        %293 = vrot.lane.b32.xlu0 %v281, 34
        %v294 = vpop.permute.xlu0 %293
        %vm295 = vcmask 277504
        %v296 = vsel %vm295, %v290, %v292
        %v297 = vsel %vm295, %v292, %v294
        %v300 = vsel %vm284, %v296, 0.0
        %v301 = vsel %vm285, %v297, 0.0
        %302 = vst [vmem:[#allocation4 + $0x10] sm:$0xff] %v300
        %303 = vst [vmem:[#allocation4 + $0x18] sm:$0xff] %v301
        %v304 = vld [vmem:[%s274 + $0x10] sm:$0xff]
        %v305 = vld [vmem:[%s274 + $0x18] sm:$0xff]
        %v306 = vld [vmem:[%s274 + $0x20] sm:$0xff]
        %310 = vrot.lane.b32.xlu0 %v304, 32
        %v311 = vpop.permute.xlu0 %310
        %312 = vrot.lane.b32.xlu0 %v305, 32
        %v313 = vpop.permute.xlu0 %312
        %314 = vrot.lane.b32.xlu0 %v306, 32
        %v315 = vpop.permute.xlu0 %314
        %vm316 = vcmask 261120
        %v317 = vsel %vm316, %v311, %v313
        %v318 = vsel %vm316, %v313, %v315
        %321 = vst [vmem:[#allocation4 + $0x20] sm:$0xff] %v317
        %322 = vst [vmem:[#allocation4 + $0x28] sm:$0xff] %v318
        %v323 = vld [vmem:[%s274 + $0x10] sm:$0xff]
        %v324 = vld [vmem:[%s274 + $0x18] sm:$0xff]
        %v325 = vld [vmem:[%s274 + $0x20] sm:$0xff]
        %v326 = vsel %vm252, 1, 0
        %v327 = vsel %vm253, 1, 0
        %vm328 = vcmp.eq.s32.totalorder %v326, 1
        %vm329 = vcmp.eq.s32.totalorder %v327, 1
        %333 = vrot.lane.b32.xlu0 %v323, 30
        %v334 = vpop.permute.xlu0 %333
        %335 = vrot.lane.b32.xlu0 %v324, 30
        %v336 = vpop.permute.xlu0 %335
        %337 = vrot.lane.b32.xlu0 %v325, 30
        %v338 = vpop.permute.xlu0 %337
        %vm339 = vcmask 244736
        %v340 = vsel %vm339, %v334, %v336
        %v341 = vsel %vm339, %v336, %v338
        %v344 = vsel %vm328, %v340, 0.0
        %v345 = vsel %vm329, %v341, 0.0
        %346 = vst [vmem:[#allocation4 + $0x30] sm:$0xff] %v344
        %347 = vst [vmem:[#allocation4 + $0x38] sm:$0xff] %v345
        %v348 = vld [vmem:[%s274 + $0x10] sm:$0xff]
        %v349 = vld [vmem:[%s274 + $0x18] sm:$0xff]
        %v350 = vld [vmem:[%s274 + $0x20] sm:$0xff]
        %354 = vrot.lane.b32.xlu0 %v348, 2
        %v355 = vpop.permute.xlu0 %354
        %356 = vrot.lane.b32.xlu0 %v349, 2
        %v357 = vpop.permute.xlu0 %356
        %358 = vrot.lane.b32.xlu0 %v350, 2
        %v359 = vpop.permute.xlu0 %358
        %vm360 = vcmask 15360
        %v361 = vsel %vm360, %v355, %v357
        %v362 = vsel %vm360, %v357, %v359
        %v365 = vsel %vm284, %v361, 0.0
        %v366 = vsel %vm285, %v362, 0.0
        %367 = vst [vmem:[#allocation4 + $0x40] sm:$0xff] %v365
        %368 = vst [vmem:[#allocation4 + $0x48] sm:$0xff] %v366
        %v369 = vld [vmem:[%s274 + $0x18] sm:$0xff]
        %v370 = vld [vmem:[%s274 + $0x20] sm:$0xff]
        %v371 = vld [vmem:[%s274 + $0x28] sm:$0xff]
        %375 = vrot.lane.b32.xlu0 %v369, 126
        %v376 = vpop.permute.xlu0 %375
        %377 = vrot.lane.b32.xlu0 %v370, 126
        %v378 = vpop.permute.xlu0 %377
        %379 = vrot.lane.b32.xlu0 %v371, 126
        %v380 = vpop.permute.xlu0 %379
        %vm381 = vcmask 1031168
        %v382 = vsel %vm381, %v376, %v378
        %v383 = vsel %vm381, %v378, %v380
        %v386 = vsel %vm328, %v382, 0.0
        %v387 = vsel %vm329, %v383, 0.0
        %388 = vst [vmem:[#allocation4 + $0x50] sm:$0xff] %v386
        %389 = vst [vmem:[#allocation4 + $0x58] sm:$0xff] %v387
        %v390 = vld [vmem:[%s274 + $0x18] sm:$0xff]
        %v391 = vld [vmem:[%s274 + $0x20] sm:$0xff]
        %v392 = vld [vmem:[%s274 + $0x28] sm:$0xff]
        %396 = vrot.lane.b32.xlu0 %v390, 98
        %v397 = vpop.permute.xlu0 %396
        %398 = vrot.lane.b32.xlu0 %v391, 98
        %v399 = vpop.permute.xlu0 %398
        %400 = vrot.lane.b32.xlu0 %v392, 98
        %v401 = vpop.permute.xlu0 %400
        %vm402 = vcmask 801792
        %v403 = vsel %vm402, %v397, %v399
        %v404 = vsel %vm402, %v399, %v401
        %v407 = vsel %vm284, %v403, 0.0
        %v408 = vsel %vm285, %v404, 0.0
        %409 = vst [vmem:[#allocation4 + $0x60] sm:$0xff] %v407
        %410 = vst [vmem:[#allocation4 + $0x68] sm:$0xff] %v408
        %v411 = vld [vmem:[%s274 + $0x18] sm:$0xff]
        %v412 = vld [vmem:[%s274 + $0x20] sm:$0xff]
        %v413 = vld [vmem:[%s274 + $0x28] sm:$0xff]
        %417 = vrot.lane.b32.xlu0 %v411, 96
        %v418 = vpop.permute.xlu0 %417
        %419 = vrot.lane.b32.xlu0 %v412, 96
        %v420 = vpop.permute.xlu0 %419
        %421 = vrot.lane.b32.xlu0 %v413, 96
        %v422 = vpop.permute.xlu0 %421
        %vm423 = vcmask 785408
        %v424 = vsel %vm423, %v418, %v420
        %v425 = vsel %vm423, %v420, %v422
        %428 = vst [vmem:[#allocation4 + $0x70] sm:$0xff] %v424
        %429 = vst [vmem:[#allocation4 + $0x78] sm:$0xff] %v425
        %v430 = vld [vmem:[%s274 + $0x18] sm:$0xff]
        %v431 = vld [vmem:[%s274 + $0x20] sm:$0xff]
        %v432 = vld [vmem:[%s274 + $0x28] sm:$0xff]
        %436 = vrot.lane.b32.xlu0 %v430, 94
        %v437 = vpop.permute.xlu0 %436
        %438 = vrot.lane.b32.xlu0 %v431, 94
        %v439 = vpop.permute.xlu0 %438
        %440 = vrot.lane.b32.xlu0 %v432, 94
        %v441 = vpop.permute.xlu0 %440
        %vm442 = vcmask 769024
        %v443 = vsel %vm442, %v437, %v439
        %v444 = vsel %vm442, %v439, %v441
        %v447 = vsel %vm328, %v443, 0.0
        %v448 = vsel %vm329, %v444, 0.0
        %449 = vst [vmem:[#allocation4 + $0x80] sm:$0xff] %v447
        %450 = vst [vmem:[#allocation4 + $0x88] sm:$0xff] %v448
        %v451 = vld [vmem:[#allocation3] sm:$0xff]
        %v452 = vld [vmem:[#allocation3 + $0x18] sm:$0xff]
        %v453 = vld [vmem:[#allocation3 + $0x30] sm:$0xff]
        %v454 = vld [vmem:[#allocation3 + $0x48] sm:$0xff]
        %v455 = vld [vmem:[#allocation4] sm:$0xff]
        %v456 = vld [vmem:[#allocation4 + $0x8] sm:$0xff]
        %v457 = vld [vmem:[#allocation4 + $0x10] sm:$0xff]
        %v458 = vld [vmem:[#allocation4 + $0x18] sm:$0xff]
        %v459 = vld [vmem:[#allocation4 + $0x20] sm:$0xff]
        %v460 = vld [vmem:[#allocation4 + $0x28] sm:$0xff]
        %v461 = vld [vmem:[#allocation4 + $0x30] sm:$0xff]
        %v462 = vld [vmem:[#allocation4 + $0x38] sm:$0xff]
        %v463 = vld [vmem:[#allocation4 + $0x40] sm:$0xff]
        %v464 = vld [vmem:[#allocation4 + $0x48] sm:$0xff]
        %v465 = vld [vmem:[#allocation4 + $0x50] sm:$0xff]
        %v466 = vld [vmem:[#allocation4 + $0x58] sm:$0xff]
        %v467 = vld [vmem:[#allocation4 + $0x60] sm:$0xff]
        %v468 = vld [vmem:[#allocation4 + $0x68] sm:$0xff]
        %v469 = vld [vmem:[#allocation4 + $0x70] sm:$0xff]
        %v470 = vld [vmem:[#allocation4 + $0x78] sm:$0xff]
        %v471 = vld [vmem:[#allocation4 + $0x80] sm:$0xff]
        %v472 = vld [vmem:[#allocation4 + $0x88] sm:$0xff]
        %v473 = vld [vmem:[%s274 + $0x10] sm:$0xff]
        %v474 = vld [vmem:[%s274 + $0x18] sm:$0xff]
        %v475 = vld [vmem:[%s274 + $0x20] sm:$0xff]
        %v476 = vsel %vm240, 1, 0
        %v477 = vsel %vm241, 1, 0
        %vm478 = vcmp.eq.s32.totalorder %v476, 1
        %vm479 = vcmp.eq.s32.totalorder %v477, 1
        %483 = vrot.lane.b32.xlu0 %v473, 68
        %v484 = vpop.permute.xlu0 %483
        %485 = vrot.lane.b32.xlu0 %v474, 68
        %v486 = vpop.permute.xlu0 %485
        %487 = vrot.lane.b32.xlu0 %v475, 68
        %v488 = vpop.permute.xlu0 %487
        %vm489 = vcmask 556032
        %v490 = vsel %vm489, %v484, %v486
        %v491 = vsel %vm489, %v486, %v488
        %v494 = vsel %vm478, %v490, 0.0
        %v495 = vsel %vm479, %v491, 0.0
        %496 = vst [vmem:[#allocation4] sm:$0xff] %v494
        %497 = vst [vmem:[#allocation4 + $0x8] sm:$0xff] %v495
        %v498 = vld [vmem:[%s274 + $0x10] sm:$0xff]
        %v499 = vld [vmem:[%s274 + $0x18] sm:$0xff]
        %v500 = vld [vmem:[%s274 + $0x20] sm:$0xff]
        %504 = vrot.lane.b32.xlu0 %v498, 64
        %v505 = vpop.permute.xlu0 %504
        %506 = vrot.lane.b32.xlu0 %v499, 64
        %v507 = vpop.permute.xlu0 %506
        %508 = vrot.lane.b32.xlu0 %v500, 64
        %v509 = vpop.permute.xlu0 %508
        %vm510 = vcmask 523264
        %v511 = vsel %vm510, %v505, %v507
        %v512 = vsel %vm510, %v507, %v509
        %515 = vst [vmem:[#allocation4 + $0x10] sm:$0xff] %v511
        %516 = vst [vmem:[#allocation4 + $0x18] sm:$0xff] %v512
        %v517 = vld [vmem:[%s274 + $0x10] sm:$0xff]
        %v518 = vld [vmem:[%s274 + $0x18] sm:$0xff]
        %v519 = vld [vmem:[%s274 + $0x20] sm:$0xff]
        %v520 = vsel %vm258, 1, 0
        %v521 = vsel %vm259, 1, 0
        %vm522 = vcmp.eq.s32.totalorder %v520, 1
        %vm523 = vcmp.eq.s32.totalorder %v521, 1
        %527 = vrot.lane.b32.xlu0 %v517, 60
        %v528 = vpop.permute.xlu0 %527
        %529 = vrot.lane.b32.xlu0 %v518, 60
        %v530 = vpop.permute.xlu0 %529
        %531 = vrot.lane.b32.xlu0 %v519, 60
        %v532 = vpop.permute.xlu0 %531
        %vm533 = vcmask 490496
        %v534 = vsel %vm533, %v528, %v530
        %v535 = vsel %vm533, %v530, %v532
        %v538 = vsel %vm522, %v534, 0.0
        %v539 = vsel %vm523, %v535, 0.0
        %540 = vst [vmem:[#allocation4 + $0x20] sm:$0xff] %v538
        %541 = vst [vmem:[#allocation4 + $0x28] sm:$0xff] %v539
        %v542 = vld [vmem:[%s274 + $0x10] sm:$0xff]
        %v543 = vld [vmem:[%s274 + $0x18] sm:$0xff]
        %v544 = vld [vmem:[%s274 + $0x20] sm:$0xff]
        %548 = vrot.lane.b32.xlu0 %v542, 4
        %v549 = vpop.permute.xlu0 %548
        %550 = vrot.lane.b32.xlu0 %v543, 4
        %v551 = vpop.permute.xlu0 %550
        %552 = vrot.lane.b32.xlu0 %v544, 4
        %v553 = vpop.permute.xlu0 %552
        %vm554 = vcmask 31744
        %v555 = vsel %vm554, %v549, %v551
        %v556 = vsel %vm554, %v551, %v553
        %v559 = vsel %vm478, %v555, 0.0
        %v560 = vsel %vm479, %v556, 0.0
        %561 = vst [vmem:[#allocation4 + $0x30] sm:$0xff] %v559
        %562 = vst [vmem:[#allocation4 + $0x38] sm:$0xff] %v560
        %v563 = vld [vmem:[%s274 + $0x18] sm:$0xff]
        %v564 = vld [vmem:[%s274 + $0x20] sm:$0xff]
        %v565 = vld [vmem:[%s274 + $0x28] sm:$0xff]
        %569 = vrot.lane.b32.xlu0 %v563, 124
        %v570 = vpop.permute.xlu0 %569
        %571 = vrot.lane.b32.xlu0 %v564, 124
        %v572 = vpop.permute.xlu0 %571
        %573 = vrot.lane.b32.xlu0 %v565, 124
        %v574 = vpop.permute.xlu0 %573
        %vm575 = vcmask 1014784
        %v576 = vsel %vm575, %v570, %v572
        %v577 = vsel %vm575, %v572, %v574
        %v580 = vsel %vm522, %v576, 0.0
        %v581 = vsel %vm523, %v577, 0.0
        %582 = vst [vmem:[#allocation4 + $0x40] sm:$0xff] %v580
        %583 = vst [vmem:[#allocation4 + $0x48] sm:$0xff] %v581
        %v584 = vld [vmem:[%s274 + $0x18] sm:$0xff]
        %v585 = vld [vmem:[%s274 + $0x20] sm:$0xff]
        %v586 = vld [vmem:[%s274 + $0x28] sm:$0xff]
        %590 = vrot.lane.b32.xlu0 %v584, 68
        %v591 = vpop.permute.xlu0 %590
        %592 = vrot.lane.b32.xlu0 %v585, 68
        %v593 = vpop.permute.xlu0 %592
        %594 = vrot.lane.b32.xlu0 %v586, 68
        %v595 = vpop.permute.xlu0 %594
        %v596 = vsel %vm489, %v591, %v593
        %v597 = vsel %vm489, %v593, %v595
        %v600 = vsel %vm478, %v596, 0.0
        %v601 = vsel %vm479, %v597, 0.0
        %602 = vst [vmem:[#allocation4 + $0x50] sm:$0xff] %v600
        %603 = vst [vmem:[#allocation4 + $0x58] sm:$0xff] %v601
        %v604 = vld [vmem:[%s274 + $0x18] sm:$0xff]
        %v605 = vld [vmem:[%s274 + $0x20] sm:$0xff]
        %v606 = vld [vmem:[%s274 + $0x28] sm:$0xff]
        %610 = vrot.lane.b32.xlu0 %v604, 64
        %v611 = vpop.permute.xlu0 %610
        %612 = vrot.lane.b32.xlu0 %v605, 64
        %v613 = vpop.permute.xlu0 %612
        %614 = vrot.lane.b32.xlu0 %v606, 64
        %v615 = vpop.permute.xlu0 %614
        %v616 = vsel %vm510, %v611, %v613
        %v617 = vsel %vm510, %v613, %v615
        %620 = vst [vmem:[#allocation4 + $0x60] sm:$0xff] %v616
        %621 = vst [vmem:[#allocation4 + $0x68] sm:$0xff] %v617
        %v622 = vld [vmem:[%s274 + $0x18] sm:$0xff]
        %v623 = vld [vmem:[%s274 + $0x20] sm:$0xff]
        %v624 = vld [vmem:[%s274 + $0x28] sm:$0xff]
        %628 = vrot.lane.b32.xlu0 %v622, 60
        %v629 = vpop.permute.xlu0 %628
        %630 = vrot.lane.b32.xlu0 %v623, 60
        %v631 = vpop.permute.xlu0 %630
        %632 = vrot.lane.b32.xlu0 %v624, 60
        %v633 = vpop.permute.xlu0 %632
        %v634 = vsel %vm533, %v629, %v631
        %v635 = vsel %vm533, %v631, %v633
        %v638 = vsel %vm522, %v634, 0.0
        %v639 = vsel %vm523, %v635, 0.0
        %640 = vst [vmem:[#allocation4 + $0x70] sm:$0xff] %v638
        %641 = vst [vmem:[#allocation4 + $0x78] sm:$0xff] %v639
        %v642 = vld [vmem:[#allocation3] sm:$0xff]
        %v643 = vld [vmem:[#allocation3 + $0x8] sm:$0xff]
        %v644 = vld [vmem:[#allocation3 + $0x18] sm:$0xff]
        %v645 = vld [vmem:[#allocation3 + $0x20] sm:$0xff]
        %v646 = vld [vmem:[#allocation3 + $0x30] sm:$0xff]
        %v647 = vld [vmem:[#allocation3 + $0x38] sm:$0xff]
        %v648 = vld [vmem:[#allocation3 + $0x48] sm:$0xff]
        %v649 = vld [vmem:[#allocation3 + $0x50] sm:$0xff]
        %v650 = vld [vmem:[#allocation4] sm:$0xff]
        %v651 = vld [vmem:[#allocation4 + $0x8] sm:$0xff]
        %v652 = vld [vmem:[#allocation4 + $0x10] sm:$0xff]
        %v653 = vld [vmem:[#allocation4 + $0x18] sm:$0xff]
        %v654 = vld [vmem:[#allocation4 + $0x20] sm:$0xff]
        %v655 = vld [vmem:[#allocation4 + $0x28] sm:$0xff]
        %v656 = vld [vmem:[#allocation4 + $0x30] sm:$0xff]
        %v657 = vld [vmem:[#allocation4 + $0x38] sm:$0xff]
        %v658 = vld [vmem:[#allocation4 + $0x40] sm:$0xff]
        %v659 = vld [vmem:[#allocation4 + $0x48] sm:$0xff]
        %v660 = vld [vmem:[#allocation4 + $0x50] sm:$0xff]
        %v661 = vld [vmem:[#allocation4 + $0x58] sm:$0xff]
        %v662 = vld [vmem:[#allocation4 + $0x60] sm:$0xff]
        %v663 = vld [vmem:[#allocation4 + $0x68] sm:$0xff]
        %v664 = vld [vmem:[#allocation4 + $0x70] sm:$0xff]
        %v665 = vld [vmem:[#allocation4 + $0x78] sm:$0xff]
        %674 = vrot.lane.b32.xlu0 %v642, 56
        %v675 = vpop.permute.xlu0 %674
        %676 = vrot.lane.b32.xlu0 %v643, 56
        %v677 = vpop.permute.xlu0 %676
        %678 = vrot.lane.b32.xlu0 %v644, 56
        %v679 = vpop.permute.xlu0 %678
        %680 = vrot.lane.b32.xlu0 %v645, 56
        %v681 = vpop.permute.xlu0 %680
        %682 = vrot.lane.b32.xlu0 %v646, 56
        %v683 = vpop.permute.xlu0 %682
        %684 = vrot.lane.b32.xlu0 %v647, 56
        %v685 = vpop.permute.xlu0 %684
        %686 = vrot.lane.b32.xlu0 %v648, 56
        %v687 = vpop.permute.xlu0 %686
        %688 = vrot.lane.b32.xlu0 %v649, 56
        %v689 = vpop.permute.xlu0 %688
        %vm690 = vcmask 457728
        %v691 = vsel %vm690, %v675, %v677
        %v692 = vsel %vm690, %v679, %v681
        %v693 = vsel %vm690, %v683, %v685
        %v694 = vsel %vm690, %v687, %v689
        %v695 = vsel %vm510, %v691, 0
        %v697 = vsel %vm510, %v692, 0
        %v699 = vsel %vm510, %v693, 0
        %v701 = vsel %vm510, %v694, 0
        %703 = vmatpush.msra.mxu0 0.0
        %704 = vmatpush.msra.mxu0 0.0
        %705 = vmatpush.msra.mxu0 0.0
        %706 = vmatpush.msra.mxu0 0.0
        %707 = vmatpush.msra.mxu0 0.0
        %708 = vmatpush.msra.mxu0 0.0
        %709 = vmatpush.msra.mxu0 0.0
        %710 = vmatpush.msra.mxu0 0.0
        %711 = vmatpush.msra.mxu0 %v664
        %712 = vmatpush.msra.mxu0 %v662
        %713 = vmatpush.msra.mxu0 %v660
        %714 = vmatpush.msra.mxu0 %v658
        %715 = vmatpush.msra.mxu0 %v656
        %716 = vmatpush.msra.mxu0 %v654
        %717 = vmatpush.msra.mxu0 %v652
        %718 = vmatpush.msra.mxu0 %v650
        %719 = vmatmul.f32.gmra.mxu0 %v695
        %v720 = vpop.f32.mrf.mxu0
        %v721 = vadd.f32 0.0, %v720
        %722 = vmatmul.f32.gmra.mxu0 %v697
        %v723 = vpop.f32.mrf.mxu0
        %v724 = vadd.f32 0.0, %v723
        %725 = vmatmul.f32.gmra.mxu0 %v699
        %v726 = vpop.f32.mrf.mxu0
        %v727 = vadd.f32 0.0, %v726
        %728 = vmatmul.f32.gmra.mxu0 %v701
        %v729 = vpop.f32.mrf.mxu0
        %v730 = vadd.f32 0.0, %v729
        %731 = vdwg.mxu0
        %732 = vmatpush.msra.mxu0 0.0
        %733 = vmatpush.msra.mxu0 0.0
        %734 = vmatpush.msra.mxu0 0.0
        %735 = vmatpush.msra.mxu0 0.0
        %736 = vmatpush.msra.mxu0 0.0
        %737 = vmatpush.msra.mxu0 0.0
        %738 = vmatpush.msra.mxu0 0.0
        %739 = vmatpush.msra.mxu0 0.0
        %740 = vmatpush.msra.mxu0 %v665
        %741 = vmatpush.msra.mxu0 %v663
        %742 = vmatpush.msra.mxu0 %v661
        %743 = vmatpush.msra.mxu0 %v659
        %744 = vmatpush.msra.mxu0 %v657
        %745 = vmatpush.msra.mxu0 %v655
        %746 = vmatpush.msra.mxu0 %v653
        %747 = vmatpush.msra.mxu0 %v651
        %748 = vmatmul.f32.gmra.mxu0 %v695
        %v749 = vpop.f32.mrf.mxu0
        %v750 = vadd.f32 0.0, %v749
        %751 = vmatmul.f32.gmra.mxu0 %v697
        %v752 = vpop.f32.mrf.mxu0
        %v753 = vadd.f32 0.0, %v752
        %754 = vmatmul.f32.gmra.mxu0 %v699
        %v755 = vpop.f32.mrf.mxu0
        %v756 = vadd.f32 0.0, %v755
        %757 = vmatmul.f32.gmra.mxu0 %v701
        %v758 = vpop.f32.mrf.mxu0
        %v759 = vadd.f32 0.0, %v758
        %760 = vdwg.mxu0
        %vm761 = vcmask 588800
        %v763 = vsel %vm761, %v451, 0
        %v766 = vsel %vm761, %v452, 0
        %v769 = vsel %vm761, %v453, 0
        %v772 = vsel %vm761, %v454, 0
        %774 = vmatpush.msra.mxu0 0.0
        %775 = vmatpush.msra.mxu0 0.0
        %776 = vmatpush.msra.mxu0 0.0
        %777 = vmatpush.msra.mxu0 0.0
        %778 = vmatpush.msra.mxu0 0.0
        %779 = vmatpush.msra.mxu0 0.0
        %780 = vmatpush.msra.mxu0 0.0
        %781 = vmatpush.msra.mxu0 %v471
        %782 = vmatpush.msra.mxu0 %v469
        %783 = vmatpush.msra.mxu0 %v467
        %784 = vmatpush.msra.mxu0 %v465
        %785 = vmatpush.msra.mxu0 %v463
        %786 = vmatpush.msra.mxu0 %v461
        %787 = vmatpush.msra.mxu0 %v459
        %788 = vmatpush.msra.mxu0 %v457
        %789 = vmatpush.msra.mxu0 %v455
        %790 = vmatmul.f32.gmra.mxu0 %v763
        %v791 = vpop.f32.mrf.mxu0
        %v792 = vadd.f32 %v721, %v791
        %793 = vmatmul.f32.gmra.mxu0 %v766
        %v794 = vpop.f32.mrf.mxu0
        %v795 = vadd.f32 %v724, %v794
        %796 = vmatmul.f32.gmra.mxu0 %v769
        %v797 = vpop.f32.mrf.mxu0
        %v798 = vadd.f32 %v727, %v797
        %799 = vmatmul.f32.gmra.mxu0 %v772
        %v800 = vpop.f32.mrf.mxu0
        %v801 = vadd.f32 %v730, %v800
        %802 = vdwg.mxu0
        %803 = vmatpush.msra.mxu0 0.0
        %804 = vmatpush.msra.mxu0 0.0
        %805 = vmatpush.msra.mxu0 0.0
        %806 = vmatpush.msra.mxu0 0.0
        %807 = vmatpush.msra.mxu0 0.0
        %808 = vmatpush.msra.mxu0 0.0
        %809 = vmatpush.msra.mxu0 0.0
        %810 = vmatpush.msra.mxu0 %v472
        %811 = vmatpush.msra.mxu0 %v470
        %812 = vmatpush.msra.mxu0 %v468
        %813 = vmatpush.msra.mxu0 %v466
        %814 = vmatpush.msra.mxu0 %v464
        %815 = vmatpush.msra.mxu0 %v462
        %816 = vmatpush.msra.mxu0 %v460
        %817 = vmatpush.msra.mxu0 %v458
        %818 = vmatpush.msra.mxu0 %v456
        %819 = vmatmul.f32.gmra.mxu0 %v763
        %v820 = vpop.f32.mrf.mxu0
        %v821 = vadd.f32 %v750, %v820
        %822 = vmatmul.f32.gmra.mxu0 %v766
        %v823 = vpop.f32.mrf.mxu0
        %v824 = vadd.f32 %v753, %v823
        %825 = vmatmul.f32.gmra.mxu0 %v769
        %v826 = vpop.f32.mrf.mxu0
        %v827 = vadd.f32 %v756, %v826
        %828 = vmatmul.f32.gmra.mxu0 %v772
        %v829 = vpop.f32.mrf.mxu0
        %v830 = vadd.f32 %v759, %v829
        %831 = vdwg.mxu0
        %v832 = vld [vmem:[%s274 + $0x8] sm:$0xff]
        %v833 = vld [vmem:[%s274 + $0x10] sm:$0xff]
        %v834 = vld [vmem:[%s274 + $0x18] sm:$0xff]
        %v835 = vsel %vm234, 1, 0
        %v836 = vsel %vm235, 1, 0
        %vm837 = vcmp.eq.s32.totalorder %v835, 1
        %vm838 = vcmp.eq.s32.totalorder %v836, 1
        %842 = vrot.lane.b32.xlu0 %v832, 8
        %v843 = vpop.permute.xlu0 %842
        %844 = vrot.lane.b32.xlu0 %v833, 8
        %v845 = vpop.permute.xlu0 %844
        %846 = vrot.lane.b32.xlu0 %v834, 8
        %v847 = vpop.permute.xlu0 %846
        %vm848 = vcmask 64512
        %v849 = vsel %vm848, %v843, %v845
        %v850 = vsel %vm848, %v845, %v847
        %v853 = vsel %vm837, %v849, 0.0
        %v854 = vsel %vm838, %v850, 0.0
        %855 = vst [vmem:[#allocation4] sm:$0xff] %v853
        %856 = vst [vmem:[#allocation4 + $0x8] sm:$0xff] %v854
        %v857 = vld [vmem:[%s274 + $0x10] sm:$0xff]
        %v858 = vld [vmem:[%s274 + $0x18] sm:$0xff]
        %859 = vst [vmem:[#allocation4 + $0x10] sm:$0xff] %v857
        %860 = vst [vmem:[#allocation4 + $0x18] sm:$0xff] %v858
        %v861 = vld [vmem:[%s274 + $0x10] sm:$0xff]
        %v862 = vld [vmem:[%s274 + $0x18] sm:$0xff]
        %v863 = vld [vmem:[%s274 + $0x20] sm:$0xff]
        %v864 = vsel %vm264, 1, 0
        %v865 = vsel %vm265, 1, 0
        %vm866 = vcmp.eq.s32.totalorder %v864, 1
        %vm867 = vcmp.eq.s32.totalorder %v865, 1
        %871 = vrot.lane.b32.xlu0 %v861, 120
        %v872 = vpop.permute.xlu0 %871
        %873 = vrot.lane.b32.xlu0 %v862, 120
        %v874 = vpop.permute.xlu0 %873
        %875 = vrot.lane.b32.xlu0 %v863, 120
        %v876 = vpop.permute.xlu0 %875
        %vm877 = vcmask 982016
        %v878 = vsel %vm877, %v872, %v874
        %v879 = vsel %vm877, %v874, %v876
        %v882 = vsel %vm866, %v878, 0.0
        %v883 = vsel %vm867, %v879, 0.0
        %884 = vst [vmem:[#allocation4 + $0x20] sm:$0xff] %v882
        %885 = vst [vmem:[#allocation4 + $0x28] sm:$0xff] %v883
        %v886 = vld [vmem:[%s274 + $0x10] sm:$0xff]
        %v887 = vld [vmem:[%s274 + $0x18] sm:$0xff]
        %v888 = vld [vmem:[%s274 + $0x20] sm:$0xff]
        %892 = vrot.lane.b32.xlu0 %v886, 8
        %v893 = vpop.permute.xlu0 %892
        %894 = vrot.lane.b32.xlu0 %v887, 8
        %v895 = vpop.permute.xlu0 %894
        %896 = vrot.lane.b32.xlu0 %v888, 8
        %v897 = vpop.permute.xlu0 %896
        %v898 = vsel %vm848, %v893, %v895
        %v899 = vsel %vm848, %v895, %v897
        %v902 = vsel %vm837, %v898, 0.0
        %v903 = vsel %vm838, %v899, 0.0
        %904 = vst [vmem:[#allocation4 + $0x30] sm:$0xff] %v902
        %905 = vst [vmem:[#allocation4 + $0x38] sm:$0xff] %v903
        %v906 = vld [vmem:[%s274 + $0x18] sm:$0xff]
        %v907 = vld [vmem:[%s274 + $0x20] sm:$0xff]
        %v908 = vld [vmem:[%s274 + $0x28] sm:$0xff]
        %912 = vrot.lane.b32.xlu0 %v906, 120
        %v913 = vpop.permute.xlu0 %912
        %914 = vrot.lane.b32.xlu0 %v907, 120
        %v915 = vpop.permute.xlu0 %914
        %916 = vrot.lane.b32.xlu0 %v908, 120
        %v917 = vpop.permute.xlu0 %916
        %v918 = vsel %vm877, %v913, %v915
        %v919 = vsel %vm877, %v915, %v917
        %v922 = vsel %vm866, %v918, 0.0
        %v923 = vsel %vm867, %v919, 0.0
        %924 = vst [vmem:[#allocation4 + $0x40] sm:$0xff] %v922
        %925 = vst [vmem:[#allocation4 + $0x48] sm:$0xff] %v923
        %v926 = vld [vmem:[%s274 + $0x18] sm:$0xff]
        %v927 = vld [vmem:[%s274 + $0x20] sm:$0xff]
        %v928 = vld [vmem:[%s274 + $0x28] sm:$0xff]
        %932 = vrot.lane.b32.xlu0 %v926, 8
        %v933 = vpop.permute.xlu0 %932
        %934 = vrot.lane.b32.xlu0 %v927, 8
        %v935 = vpop.permute.xlu0 %934
        %936 = vrot.lane.b32.xlu0 %v928, 8
        %v937 = vpop.permute.xlu0 %936
        %v938 = vsel %vm848, %v933, %v935
        %v939 = vsel %vm848, %v935, %v937
        %v942 = vsel %vm837, %v938, 0.0
        %v943 = vsel %vm838, %v939, 0.0
        %944 = vst [vmem:[#allocation4 + $0x50] sm:$0xff] %v942
        %945 = vst [vmem:[#allocation4 + $0x58] sm:$0xff] %v943
        %v946 = vld [vmem:[%s274 + $0x20] sm:$0xff]
        %v947 = vld [vmem:[%s274 + $0x28] sm:$0xff]
        %948 = vst [vmem:[#allocation4 + $0x60] sm:$0xff] %v946
        %949 = vst [vmem:[#allocation4 + $0x68] sm:$0xff] %v947
        %v950 = vld [vmem:[%s274 + $0x20] sm:$0xff]
        %v951 = vld [vmem:[%s274 + $0x28] sm:$0xff]
        %v952 = vld [vmem:[%s274 + $0x30] sm:$0xff]
        %956 = vrot.lane.b32.xlu0 %v950, 120
        %v957 = vpop.permute.xlu0 %956
        %958 = vrot.lane.b32.xlu0 %v951, 120
        %v959 = vpop.permute.xlu0 %958
        %960 = vrot.lane.b32.xlu0 %v952, 120
        %v961 = vpop.permute.xlu0 %960
        %v962 = vsel %vm877, %v957, %v959
        %v963 = vsel %vm877, %v959, %v961
        %v966 = vsel %vm866, %v962, 0.0
        %v967 = vsel %vm867, %v963, 0.0
        %968 = vst [vmem:[#allocation4 + $0x70] sm:$0xff] %v966
        %969 = vst [vmem:[#allocation4 + $0x78] sm:$0xff] %v967
        %v970 = vld [vmem:[#allocation3 + $0x8] sm:$0xff]
        %v971 = vld [vmem:[#allocation3 + $0x20] sm:$0xff]
        %v972 = vld [vmem:[#allocation3 + $0x38] sm:$0xff]
        %v973 = vld [vmem:[#allocation3 + $0x50] sm:$0xff]
        %v974 = vld [vmem:[#allocation4] sm:$0xff]
        %v975 = vld [vmem:[#allocation4 + $0x8] sm:$0xff]
        %v976 = vld [vmem:[#allocation4 + $0x10] sm:$0xff]
        %v977 = vld [vmem:[#allocation4 + $0x18] sm:$0xff]
        %v978 = vld [vmem:[#allocation4 + $0x20] sm:$0xff]
        %v979 = vld [vmem:[#allocation4 + $0x28] sm:$0xff]
        %v980 = vld [vmem:[#allocation4 + $0x30] sm:$0xff]
        %v981 = vld [vmem:[#allocation4 + $0x38] sm:$0xff]
        %v982 = vld [vmem:[#allocation4 + $0x40] sm:$0xff]
        %v983 = vld [vmem:[#allocation4 + $0x48] sm:$0xff]
        %v984 = vld [vmem:[#allocation4 + $0x50] sm:$0xff]
        %v985 = vld [vmem:[#allocation4 + $0x58] sm:$0xff]
        %v986 = vld [vmem:[#allocation4 + $0x60] sm:$0xff]
        %v987 = vld [vmem:[#allocation4 + $0x68] sm:$0xff]
        %v988 = vld [vmem:[#allocation4 + $0x70] sm:$0xff]
        %v989 = vld [vmem:[#allocation4 + $0x78] sm:$0xff]
        %994 = vrot.lane.b32.xlu0 %v970, 120
        %v995 = vpop.permute.xlu0 %994
        %996 = vrot.lane.b32.xlu0 %v971, 120
        %v997 = vpop.permute.xlu0 %996
        %998 = vrot.lane.b32.xlu0 %v972, 120
        %v999 = vpop.permute.xlu0 %998
        %1000 = vrot.lane.b32.xlu0 %v973, 120
        %v1001 = vpop.permute.xlu0 %1000
        %v1002 = vsel %vm510, %v995, 0
        %v1004 = vsel %vm510, %v997, 0
        %v1006 = vsel %vm510, %v999, 0
        %v1008 = vsel %vm510, %v1001, 0
        %1010 = vmatpush.msra.mxu0 0.0
        %1011 = vmatpush.msra.mxu0 0.0
        %1012 = vmatpush.msra.mxu0 0.0
        %1013 = vmatpush.msra.mxu0 0.0
        %1014 = vmatpush.msra.mxu0 0.0
        %1015 = vmatpush.msra.mxu0 0.0
        %1016 = vmatpush.msra.mxu0 0.0
        %1017 = vmatpush.msra.mxu0 0.0
        %1018 = vmatpush.msra.mxu0 %v988
        %1019 = vmatpush.msra.mxu0 %v986
        %1020 = vmatpush.msra.mxu0 %v984
        %1021 = vmatpush.msra.mxu0 %v982
        %1022 = vmatpush.msra.mxu0 %v980
        %1023 = vmatpush.msra.mxu0 %v978
        %1024 = vmatpush.msra.mxu0 %v976
        %1025 = vmatpush.msra.mxu0 %v974
        %1026 = vmatmul.f32.gmra.mxu0 %v1002
        %v1027 = vpop.f32.mrf.mxu0
        %v1028 = vadd.f32 0.0, %v1027
        %1029 = vmatmul.f32.gmra.mxu0 %v1004
        %v1030 = vpop.f32.mrf.mxu0
        %v1031 = vadd.f32 0.0, %v1030
        %1032 = vmatmul.f32.gmra.mxu0 %v1006
        %v1033 = vpop.f32.mrf.mxu0
        %v1034 = vadd.f32 0.0, %v1033
        %1035 = vmatmul.f32.gmra.mxu0 %v1008
        %v1036 = vpop.f32.mrf.mxu0
        %v1037 = vadd.f32 0.0, %v1036
        %1038 = vdwg.mxu0
        %1039 = vmatpush.msra.mxu0 0.0
        %1040 = vmatpush.msra.mxu0 0.0
        %1041 = vmatpush.msra.mxu0 0.0
        %1042 = vmatpush.msra.mxu0 0.0
        %1043 = vmatpush.msra.mxu0 0.0
        %1044 = vmatpush.msra.mxu0 0.0
        %1045 = vmatpush.msra.mxu0 0.0
        %1046 = vmatpush.msra.mxu0 0.0
        %1047 = vmatpush.msra.mxu0 %v989
        %1048 = vmatpush.msra.mxu0 %v987
        %1049 = vmatpush.msra.mxu0 %v985
        %1050 = vmatpush.msra.mxu0 %v983
        %1051 = vmatpush.msra.mxu0 %v981
        %1052 = vmatpush.msra.mxu0 %v979
        %1053 = vmatpush.msra.mxu0 %v977
        %1054 = vmatpush.msra.mxu0 %v975
        %1055 = vmatmul.f32.gmra.mxu0 %v1002
        %v1056 = vpop.f32.mrf.mxu0
        %v1057 = vadd.f32 0.0, %v1056
        %1058 = vmatmul.f32.gmra.mxu0 %v1004
        %v1059 = vpop.f32.mrf.mxu0
        %v1060 = vadd.f32 0.0, %v1059
        %1061 = vmatmul.f32.gmra.mxu0 %v1006
        %v1062 = vpop.f32.mrf.mxu0
        %v1063 = vadd.f32 0.0, %v1062
        %1064 = vmatmul.f32.gmra.mxu0 %v1008
        %v1065 = vpop.f32.mrf.mxu0
        %v1066 = vadd.f32 0.0, %v1065
        %1067 = vdwg.mxu0
        %v1068 = vadd.f32 %v792, %v1028
        %v1069 = vadd.f32 %v821, %v1057
        %v1070 = vadd.f32 %v795, %v1031
        %v1071 = vadd.f32 %v824, %v1060
        %v1072 = vadd.f32 %v798, %v1034
        %v1073 = vadd.f32 %v827, %v1063
        %v1074 = vadd.f32 %v801, %v1037
        %v1075 = vadd.f32 %v830, %v1066
        %v1076 = vld [vmem:[%s274] sm:$0xff]
        %v1077 = vld [vmem:[%s274 + $0x8] sm:$0xff]
        %v1078 = vld [vmem:[%s274 + $0x10] sm:$0xff]
        %v1079 = vsel %vm228, 1, 0
        %v1080 = vsel %vm229, 1, 0
        %vm1081 = vcmp.eq.s32.totalorder %v1079, 1
        %vm1082 = vcmp.eq.s32.totalorder %v1080, 1
        %1086 = vrot.lane.b32.xlu0 %v1076, 16
        %v1087 = vpop.permute.xlu0 %1086
        %1088 = vrot.lane.b32.xlu0 %v1077, 16
        %v1089 = vpop.permute.xlu0 %1088
        %1090 = vrot.lane.b32.xlu0 %v1078, 16
        %v1091 = vpop.permute.xlu0 %1090
        %vm1092 = vcmask 130048
        %v1093 = vsel %vm1092, %v1087, %v1089
        %v1094 = vsel %vm1092, %v1089, %v1091
        %v1097 = vsel %vm1081, %v1093, 0.0
        %v1098 = vsel %vm1082, %v1094, 0.0
        %1099 = vst [vmem:[#allocation4] sm:$0xff] %v1097
        %1100 = vst [vmem:[#allocation4 + $0x8] sm:$0xff] %v1098
        %v1101 = vld [vmem:[%s274 + $0x8] sm:$0xff]
        %v1102 = vld [vmem:[%s274 + $0x10] sm:$0xff]
        %1103 = vst [vmem:[#allocation4 + $0x10] sm:$0xff] %v1101
        %1104 = vst [vmem:[#allocation4 + $0x18] sm:$0xff] %v1102
        %v1105 = vld [vmem:[%s274 + $0x8] sm:$0xff]
        %v1106 = vld [vmem:[%s274 + $0x10] sm:$0xff]
        %v1107 = vld [vmem:[%s274 + $0x18] sm:$0xff]
        %v1108 = vsel %vm270, 1, 0
        %v1109 = vsel %vm271, 1, 0
        %vm1110 = vcmp.eq.s32.totalorder %v1108, 1
        %vm1111 = vcmp.eq.s32.totalorder %v1109, 1
        %1115 = vrot.lane.b32.xlu0 %v1105, 112
        %v1116 = vpop.permute.xlu0 %1115
        %1117 = vrot.lane.b32.xlu0 %v1106, 112
        %v1118 = vpop.permute.xlu0 %1117
        %1119 = vrot.lane.b32.xlu0 %v1107, 112
        %v1120 = vpop.permute.xlu0 %1119
        %vm1121 = vcmask 916480
        %v1122 = vsel %vm1121, %v1116, %v1118
        %v1123 = vsel %vm1121, %v1118, %v1120
        %v1126 = vsel %vm1110, %v1122, 0.0
        %v1127 = vsel %vm1111, %v1123, 0.0
        %1128 = vst [vmem:[#allocation4 + $0x20] sm:$0xff] %v1126
        %1129 = vst [vmem:[#allocation4 + $0x28] sm:$0xff] %v1127
        %v1130 = vld [vmem:[%s274 + $0x10] sm:$0xff]
        %v1131 = vld [vmem:[%s274 + $0x18] sm:$0xff]
        %v1132 = vld [vmem:[%s274 + $0x20] sm:$0xff]
        %1136 = vrot.lane.b32.xlu0 %v1130, 16
        %v1137 = vpop.permute.xlu0 %1136
        %1138 = vrot.lane.b32.xlu0 %v1131, 16
        %v1139 = vpop.permute.xlu0 %1138
        %1140 = vrot.lane.b32.xlu0 %v1132, 16
        %v1141 = vpop.permute.xlu0 %1140
        %v1142 = vsel %vm1092, %v1137, %v1139
        %v1143 = vsel %vm1092, %v1139, %v1141
        %v1146 = vsel %vm1081, %v1142, 0.0
        %v1147 = vsel %vm1082, %v1143, 0.0
        %1148 = vst [vmem:[#allocation4 + $0x30] sm:$0xff] %v1146
        %1149 = vst [vmem:[#allocation4 + $0x38] sm:$0xff] %v1147
        %v1150 = vld [vmem:[%s274 + $0x18] sm:$0xff]
        %v1151 = vld [vmem:[%s274 + $0x20] sm:$0xff]
        %v1152 = vld [vmem:[%s274 + $0x28] sm:$0xff]
        %1156 = vrot.lane.b32.xlu0 %v1150, 112
        %v1157 = vpop.permute.xlu0 %1156
        %1158 = vrot.lane.b32.xlu0 %v1151, 112
        %v1159 = vpop.permute.xlu0 %1158
        %1160 = vrot.lane.b32.xlu0 %v1152, 112
        %v1161 = vpop.permute.xlu0 %1160
        %v1162 = vsel %vm1121, %v1157, %v1159
        %v1163 = vsel %vm1121, %v1159, %v1161
        %v1166 = vsel %vm1110, %v1162, 0.0
        %v1167 = vsel %vm1111, %v1163, 0.0
        %1168 = vst [vmem:[#allocation4 + $0x40] sm:$0xff] %v1166
        %1169 = vst [vmem:[#allocation4 + $0x48] sm:$0xff] %v1167
        %v1170 = vld [vmem:[%s274 + $0x20] sm:$0xff]
        %v1171 = vld [vmem:[%s274 + $0x28] sm:$0xff]
        %v1172 = vld [vmem:[%s274 + $0x30] sm:$0xff]
        %1176 = vrot.lane.b32.xlu0 %v1170, 16
        %v1177 = vpop.permute.xlu0 %1176
        %1178 = vrot.lane.b32.xlu0 %v1171, 16
        %v1179 = vpop.permute.xlu0 %1178
        %1180 = vrot.lane.b32.xlu0 %v1172, 16
        %v1181 = vpop.permute.xlu0 %1180
        %v1182 = vsel %vm1092, %v1177, %v1179
        %v1183 = vsel %vm1092, %v1179, %v1181
        %v1186 = vsel %vm1081, %v1182, 0.0
        %v1187 = vsel %vm1082, %v1183, 0.0
        %1188 = vst [vmem:[#allocation4 + $0x50] sm:$0xff] %v1186
        %1189 = vst [vmem:[#allocation4 + $0x58] sm:$0xff] %v1187
        %v1190 = vld [vmem:[%s274 + $0x28] sm:$0xff]
        %v1191 = vld [vmem:[%s274 + $0x30] sm:$0xff]
        %1192 = vst [vmem:[#allocation4 + $0x60] sm:$0xff] %v1190
        %1193 = vst [vmem:[#allocation4 + $0x68] sm:$0xff] %v1191
        %v1194 = vld [vmem:[%s274 + $0x28] sm:$0xff]
        %v1195 = vld [vmem:[%s274 + $0x30] sm:$0xff]
        %v1196 = vld [vmem:[%s274 + $0x38] sm:$0xff]
        %1200 = vrot.lane.b32.xlu0 %v1194, 112
        %v1201 = vpop.permute.xlu0 %1200
        %1202 = vrot.lane.b32.xlu0 %v1195, 112
        %v1203 = vpop.permute.xlu0 %1202
        %1204 = vrot.lane.b32.xlu0 %v1196, 112
        %v1205 = vpop.permute.xlu0 %1204
        %v1206 = vsel %vm1121, %v1201, %v1203
        %v1207 = vsel %vm1121, %v1203, %v1205
        %v1210 = vsel %vm1110, %v1206, 0.0
        %v1211 = vsel %vm1111, %v1207, 0.0
        %1212 = vst [vmem:[#allocation4 + $0x70] sm:$0xff] %v1210
        %1213 = vst [vmem:[#allocation4 + $0x78] sm:$0xff] %v1211
        %v1214 = vld [vmem:[#allocation3 + $0x8] sm:$0xff]
        %v1215 = vld [vmem:[#allocation3 + $0x10] sm:$0xff]
        %v1216 = vld [vmem:[#allocation3 + $0x20] sm:$0xff]
        %v1217 = vld [vmem:[#allocation3 + $0x28] sm:$0xff]
        %v1218 = vld [vmem:[#allocation3 + $0x38] sm:$0xff]
        %v1219 = vld [vmem:[#allocation3 + $0x40] sm:$0xff]
        %v1220 = vld [vmem:[#allocation3 + $0x50] sm:$0xff]
        %v1221 = vld [vmem:[#allocation3 + $0x58] sm:$0xff]
        %v1222 = vld [vmem:[#allocation4] sm:$0xff]
        %v1223 = vld [vmem:[#allocation4 + $0x8] sm:$0xff]
        %v1224 = vld [vmem:[#allocation4 + $0x10] sm:$0xff]
        %v1225 = vld [vmem:[#allocation4 + $0x18] sm:$0xff]
        %v1226 = vld [vmem:[#allocation4 + $0x20] sm:$0xff]
        %v1227 = vld [vmem:[#allocation4 + $0x28] sm:$0xff]
        %v1228 = vld [vmem:[#allocation4 + $0x30] sm:$0xff]
        %v1229 = vld [vmem:[#allocation4 + $0x38] sm:$0xff]
        %v1230 = vld [vmem:[#allocation4 + $0x40] sm:$0xff]
        %v1231 = vld [vmem:[#allocation4 + $0x48] sm:$0xff]
        %v1232 = vld [vmem:[#allocation4 + $0x50] sm:$0xff]
        %v1233 = vld [vmem:[#allocation4 + $0x58] sm:$0xff]
        %v1234 = vld [vmem:[#allocation4 + $0x60] sm:$0xff]
        %v1235 = vld [vmem:[#allocation4 + $0x68] sm:$0xff]
        %v1236 = vld [vmem:[#allocation4 + $0x70] sm:$0xff]
        %v1237 = vld [vmem:[#allocation4 + $0x78] sm:$0xff]
        %1246 = vrot.lane.b32.xlu0 %v1214, 56
        %v1247 = vpop.permute.xlu0 %1246
        %1248 = vrot.lane.b32.xlu0 %v1215, 56
        %v1249 = vpop.permute.xlu0 %1248
        %1250 = vrot.lane.b32.xlu0 %v1216, 56
        %v1251 = vpop.permute.xlu0 %1250
        %1252 = vrot.lane.b32.xlu0 %v1217, 56
        %v1253 = vpop.permute.xlu0 %1252
        %1254 = vrot.lane.b32.xlu0 %v1218, 56
        %v1255 = vpop.permute.xlu0 %1254
        %1256 = vrot.lane.b32.xlu0 %v1219, 56
        %v1257 = vpop.permute.xlu0 %1256
        %1258 = vrot.lane.b32.xlu0 %v1220, 56
        %v1259 = vpop.permute.xlu0 %1258
        %1260 = vrot.lane.b32.xlu0 %v1221, 56
        %v1261 = vpop.permute.xlu0 %1260
        %v1262 = vsel %vm690, %v1247, %v1249
        %v1263 = vsel %vm690, %v1251, %v1253
        %v1264 = vsel %vm690, %v1255, %v1257
        %v1265 = vsel %vm690, %v1259, %v1261
        %v1266 = vsel %vm510, %v1262, 0
        %v1268 = vsel %vm510, %v1263, 0
        %v1270 = vsel %vm510, %v1264, 0
        %v1272 = vsel %vm510, %v1265, 0
        %1274 = vmatpush.msra.mxu0 0.0
        %1275 = vmatpush.msra.mxu0 0.0
        %1276 = vmatpush.msra.mxu0 0.0
        %1277 = vmatpush.msra.mxu0 0.0
        %1278 = vmatpush.msra.mxu0 0.0
        %1279 = vmatpush.msra.mxu0 0.0
        %1280 = vmatpush.msra.mxu0 0.0
        %1281 = vmatpush.msra.mxu0 0.0
        %1282 = vmatpush.msra.mxu0 %v1236
        %1283 = vmatpush.msra.mxu0 %v1234
        %1284 = vmatpush.msra.mxu0 %v1232
        %1285 = vmatpush.msra.mxu0 %v1230
        %1286 = vmatpush.msra.mxu0 %v1228
        %1287 = vmatpush.msra.mxu0 %v1226
        %1288 = vmatpush.msra.mxu0 %v1224
        %1289 = vmatpush.msra.mxu0 %v1222
        %1290 = vmatmul.f32.gmra.mxu0 %v1266
        %v1291 = vpop.f32.mrf.mxu0
        %v1292 = vadd.f32 0.0, %v1291
        %1293 = vmatmul.f32.gmra.mxu0 %v1268
        %v1294 = vpop.f32.mrf.mxu0
        %v1295 = vadd.f32 0.0, %v1294
        %1296 = vmatmul.f32.gmra.mxu0 %v1270
        %v1297 = vpop.f32.mrf.mxu0
        %v1298 = vadd.f32 0.0, %v1297
        %1299 = vmatmul.f32.gmra.mxu0 %v1272
        %v1300 = vpop.f32.mrf.mxu0
        %v1301 = vadd.f32 0.0, %v1300
        %1302 = vdwg.mxu0
        %1303 = vmatpush.msra.mxu0 0.0
        %1304 = vmatpush.msra.mxu0 0.0
        %1305 = vmatpush.msra.mxu0 0.0
        %1306 = vmatpush.msra.mxu0 0.0
        %1307 = vmatpush.msra.mxu0 0.0
        %1308 = vmatpush.msra.mxu0 0.0
        %1309 = vmatpush.msra.mxu0 0.0
        %1310 = vmatpush.msra.mxu0 0.0
        %1311 = vmatpush.msra.mxu0 %v1237
        %1312 = vmatpush.msra.mxu0 %v1235
        %1313 = vmatpush.msra.mxu0 %v1233
        %1314 = vmatpush.msra.mxu0 %v1231
        %1315 = vmatpush.msra.mxu0 %v1229
        %1316 = vmatpush.msra.mxu0 %v1227
        %1317 = vmatpush.msra.mxu0 %v1225
        %1318 = vmatpush.msra.mxu0 %v1223
        %1319 = vmatmul.f32.gmra.mxu0 %v1266
        %v1320 = vpop.f32.mrf.mxu0
        %v1321 = vadd.f32 0.0, %v1320
        %1322 = vmatmul.f32.gmra.mxu0 %v1268
        %v1323 = vpop.f32.mrf.mxu0
        %v1324 = vadd.f32 0.0, %v1323
        %1325 = vmatmul.f32.gmra.mxu0 %v1270
        %v1326 = vpop.f32.mrf.mxu0
        %v1327 = vadd.f32 0.0, %v1326
        %1328 = vmatmul.f32.gmra.mxu0 %v1272
        %v1329 = vpop.f32.mrf.mxu0
        %v1330 = vadd.f32 0.0, %v1329
        %1331 = vdwg.mxu0
        %v1332 = vadd.f32 %v1068, %v1292
        %v1333 = vadd.f32 %v1069, %v1321
        %v1334 = vadd.f32 %v1070, %v1295
        %v1335 = vadd.f32 %v1071, %v1324
        %v1336 = vadd.f32 %v1072, %v1298
        %v1337 = vadd.f32 %v1073, %v1327
        %v1338 = vadd.f32 %v1074, %v1301
        %v1339 = vadd.f32 %v1075, %v1330
        %v1340 = vld [vmem:[%s2] sm:$0xff]
        %v1341 = vld [vmem:[%s2 + $0x8] sm:$0xff]
        %v1342 = vld [vmem:[%s2 + $0x10] sm:$0xff]
        %v1343 = vld [vmem:[%s2 + $0x18] sm:$0xff]
        %1345 = vset.pattern.permute.xlu0 0
        %1346 = vperm.xlu0 %1345, %v1340
        %v1347 = vpop.permute.xlu0 %1346
        %1350 = vset.pattern.permute.xlu0 0
        %1351 = vperm.xlu0 %1350, %v1341
        %v1352 = vpop.permute.xlu0 %1351
        %1355 = vset.pattern.permute.xlu0 0
        %1356 = vperm.xlu0 %1355, %v1342
        %v1357 = vpop.permute.xlu0 %1356
        %1360 = vset.pattern.permute.xlu0 0
        %1361 = vperm.xlu0 %1360, %v1343
        %v1362 = vpop.permute.xlu0 %1361
        %v1364 = vadd.f32 %v1332, %v1347
        %v1365 = vadd.f32 %v1333, %v1347
        %v1366 = vadd.f32 %v1334, %v1352
        %v1367 = vadd.f32 %v1335, %v1352
        %v1368 = vadd.f32 %v1336, %v1357
        %v1369 = vadd.f32 %v1337, %v1357
        %v1370 = vadd.f32 %v1338, %v1362
        %v1371 = vadd.f32 %v1339, %v1362
        %1372 = vst [vmem:[%s96] sm:$0xff] %v1364
        %1373 = vst [vmem:[%s96 + $0x8] sm:$0xff] %v1365
        %1374 = vst [vmem:[%s96 + $0x10] sm:$0xff] %v1366
        %1375 = vst [vmem:[%s96 + $0x18] sm:$0xff] %v1367
        %1376 = vst [vmem:[%s96 + $0x20] sm:$0xff] %v1368
        %1377 = vst [vmem:[%s96 + $0x28] sm:$0xff] %v1369
        %1378 = vst [vmem:[%s96 + $0x30] sm:$0xff] %v1370
        %1379 = vst [vmem:[%s96 + $0x38] sm:$0xff] %v1371
        %s1380 = sand.u32 %s46, 1
        %s1381 = scalar_lea.sflag [#allocation8], %s1380
        %s1382 = sand.u32 %s46, 1
        %s1383 = smul.addr %s1382, 64
        %s1384 = scalar_lea.vmem [#allocation7], %s1383
        // Predicated region
        $region75: #{tpu_custom_call.1} parent=23 // pred_check
          %p1385 = pneg %p56
        $region76: #{tpu_custom_call.1} parent=23 // pred_check_branch
          %1387 = sbr.rel (%p1385) target = $region78
        $region77: #{tpu_custom_call.1} parent=23 // pred_region
          %1389 = vsyncadd %s1381, 0
          %s1390 = smul.addr %s17, 8
          %s1391 = smul.addr %s1390, 8
          %s1392 = scalar_lea.hbm %s3, %s1391
          %s1393 = sshll.u32 %s1384, 4
          %s1394 = int_to_ptr.vmem [resolvable:$true] %s1393
          %s1395 = sshll.u32 %s1392, 4
          %s1396 = int_to_ptr.hbm [resolvable:$true] %s1395
          %1401 = dma.vmem_to_hbm [thread:$0]  %s1394, 1024, %s1396, %s1381, 256, 256, 16
        $region78: #{tpu_custom_call.1} parent=23 // pred_fallthru
          _
      $region24: #{tpu_custom_call.1} parent=5 // pred_fallthru
        _
      %p1402 = scmp.le.s32.totalorder 2, %s12
      // Predicated region
      $region79: #{tpu_custom_call.1} parent=5 // pred_check
        %p1403 = pneg %p1402
      $region80: #{tpu_custom_call.1} parent=5 // pred_check_branch
        %1405 = sbr.rel (%p1403) target = $region82
      $region81: #{tpu_custom_call.1} parent=5 // pred_region
        %s1406 = ssub.s32 %s12, 2
        // Predicated region
        $region83: #{tpu_custom_call.1} parent=81 // pred_check
          %p1407 = pneg %p62
        $region84: #{tpu_custom_call.1} parent=81 // pred_check_branch
          %1409 = sbr.rel (%p1407) target = $region86
        $region85: #{tpu_custom_call.1} parent=81 // pred_region
          %s1410 = sand.u32 %s47, 1
          %s1411 = scalar_lea.sflag [#allocation8], %s1410
          %s1412 = sand.u32 %s47, 1
          %s1413 = smul.addr %s1412, 64
          %s1414 = scalar_lea.vmem [#allocation7], %s1413
          %1416 = dma.done %s1411, 1024
        $region86: #{tpu_custom_call.1} parent=81 // pred_fallthru
          _
      $region82: #{tpu_custom_call.1} parent=5 // pred_fallthru
        _
    $region6: #{tpu_custom_call.1} parent=1 // loop_footer
      %s16 = sadd.s32 1, %s12
    $region7: #{tpu_custom_call.1} parent=1 // loop_footer_branch
      %11 = sbr.rel target = $region3
    $region8: #{tpu_custom_call.1} parent=1 // loop_exit
      _
    %1417 = vsyncpa [#allocation8], 1
    %s1418 = scalar_lea.sflag [#allocation8], 1
    %1419 = vsyncpa %s1418, 1
  %1420 = vsyncmov [#allocation5]
  %s1421 = vpop.sfrf %1420
  %p1422 = scmp.eq.s32.totalorder %s1421, 0
  %p1423 = pneg %p1422
  %1425 = shalt.err (%p1423)
  %s1426 = scalar_lea.sflag [#allocation5], 1
  %1427 = vsyncmov %s1426
  %s1428 = vpop.sfrf %1427
  %p1429 = scmp.eq.s32.totalorder %s1428, 0
  %p1430 = pneg %p1429
  %1432 = shalt.err (%p1430)
  %1433 = vsyncmov [#allocation6]
  %s1434 = vpop.sfrf %1433
  %p1435 = scmp.eq.s32.totalorder %s1434, 0
  %p1436 = pneg %p1435
  %1438 = shalt.err (%p1436)

</llo_original>
